<compile_context>
chip_gen: v7x
topology: tpu7x:2x2x1
jax: 0.10.0
libtpu: 0.0.40
codegen_flags: <defaults>
</compile_context>

<pallas_src>
import functools
import math

import jax
import jax.numpy as jnp
from jax import lax
from jax.experimental import pallas as pl
from jax.experimental.pallas import tpu as pltpu

LANE = 128


# ------------------------- shared numeric helpers -------------------------

def _round_up(n, m=LANE):
    return ((n + m - 1) // m) * m


def _pad2d(a, rows, cols):
    return jnp.pad(a, ((0, rows - a.shape[0]), (0, cols - a.shape[1])))


def _bdot(a, w):
    """MXU matmul: bf16 operands, f32 accumulation."""
    return jnp.dot(a.astype(jnp.bfloat16), w.astype(jnp.bfloat16),
                   preferred_element_type=jnp.float32)


def _bdot_t(a, b):
    """a @ b.T without materializing the transpose (contract last dims)."""
    return lax.dot_general(
        a.astype(jnp.bfloat16), b.astype(jnp.bfloat16),
        dimension_numbers=(((a.ndim - 1,), (b.ndim - 1,)), ((), ())),
        preferred_element_type=jnp.float32)


def _softmax_approx(s):
    # EUP exp + EUP approximate reciprocal (keeps the VALU slot free).
    m = jnp.max(s, axis=-1, keepdims=True)
    e = jnp.exp(s - m)
    return e * pl.reciprocal(jnp.sum(e, axis=-1, keepdims=True), approx=True)


def _masked_layernorm(v, g, b, feat_mask, inv_d, eps=1e-5):
    # v is zero in the padded lanes, so plain sums divided by the *true*
    # feature count give the exact unpadded statistics; (v - mu) is masked so
    # the padded lanes do not pollute the variance and stay zero on output
    # (beta is zero-padded).
    mu = jnp.sum(v, axis=-1, keepdims=True) * inv_d
    diff = jnp.where(feat_mask, v - mu, 0.0)
    var = jnp.sum(diff * diff, axis=-1, keepdims=True) * inv_d
    return diff * lax.rsqrt(var + eps) * g + b


# --------------------------------- kernel ---------------------------------

def decoder_layer_kernel(
    d_true, a_true,                # static: real (unpadded) D and A
    x_ref, enc_ref, mask_ref, pe_ref,
    wqkv_ref,                      # (Dp, 3Dp) bf16  fused self-attn Q|K|V
    g1_ref, b1_ref,                # norm1 (1, Dp)
    wcq_ref,                       # (Dp, Ap)  bf16  cross-attn query proj
    wckv_ref,                      # (Dp, 2Ap) bf16  fused cross-attn K|V
    wpv_ref, bpv_ref,              # projectbacktovocab (Ap, Dp) bf16, (1, Dp)
    g2_ref, b2_ref,                # norm2 (1, Dp)
    w1_ref, bf1_ref,               # feed-forward (Dp, Hp) bf16, (1, Hp)
    w2_ref, bf2_ref,               # feed-forward (Hp, Dp) bf16, (1, Dp)
    g3_ref, b3_ref,                # norm3 (1, Dp)
    o_ref,                         # (S, Dp) f32 for this batch element
):
    Dp = wqkv_ref.shape[0]
    Ap = wcq_ref.shape[1]
    inv_d = 1.0 / d_true

    # lane mask selecting the real (unpadded) feature lanes; hoisted once.
    feat_mask = lax.broadcasted_iota(jnp.int32, (1, Dp), 1) < d_true

    x = x_ref[...]                 # (S, Dp)   this batch element
    enc = enc_ref[...]             # (Se, Dp)

    # 1) positional encoding
    emb = x + pe_ref[...]

    # 2) masked self-attention (one fused QKV matmul; 128-aligned splits)
    qkv = _bdot(emb, wqkv_ref[...])                       # (S, 3Dp) f32 acc
    q = qkv[:, :Dp]
    k = qkv[:, Dp:2 * Dp]
    v = qkv[:, 2 * Dp:]
    scores = _bdot_t(q, k) * (1.0 / math.sqrt(d_true))    # (S, S)
    scores = jnp.where(mask_ref[...] > 0.0, scores, -1e9)
    prob = _softmax_approx(scores)
    attn = _bdot(prob, v)                                 # (S, Dp)

    # 3) norm1(attn + embedding)
    x1 = _masked_layernorm(attn + emb, g1_ref[...], b1_ref[...],
                           feat_mask, inv_d)

    # 4) cross attention (query from x1, key/value from encoder output)
    cq = _bdot(x1, wcq_ref[...])                          # (S, Ap)
    ckv = _bdot(enc, wckv_ref[...])                       # (Se, 2Ap)
    ck = ckv[:, :Ap]
    cv = ckv[:, Ap:]
    cscores = _bdot_t(cq, ck) * (1.0 / math.sqrt(a_true))
    cprob = _softmax_approx(cscores)
    cattn = _bdot(cprob, cv)                              # (S, Ap)

    # 5) project back to vocab dim
    proj = _bdot(cattn, wpv_ref[...]) + bpv_ref[...]

    # 6) norm2(x1 + proj)
    x2 = _masked_layernorm(x1 + proj, g2_ref[...], b2_ref[...],
                           feat_mask, inv_d)

    # 7) feed-forward
    h = jnp.maximum(_bdot(x2, w1_ref[...]) + bf1_ref[...], 0.0)
    ff = _bdot(h, w2_ref[...]) + bf2_ref[...]

    # 8) norm3(x2 + ff)  -- Dp = 128 -> lane-dense, unmasked store
    o_ref[...] = _masked_layernorm(x2 + ff, g3_ref[...], b3_ref[...],
                                   feat_mask, inv_d)


# -------------------------------- wrapper ----------------------------------

def decoder_layer(x, enc, mask, params):
    B, S, D = x.shape
    _, Se, _ = enc.shape
    A = params["wcq"].shape[-1]
    H = params["w1"].shape[-1]
    Dp, Ap, Hp = _round_up(D), _round_up(A), _round_up(H)
    BS, BSe = B * S, B * Se
    bf16, f32 = jnp.bfloat16, jnp.float32

    # ---- one-time operand packing / lane padding (outside the kernel) ----
    x2d = _pad2d(x.reshape(BS, D).astype(f32), BS, Dp)
    enc2d = _pad2d(enc.reshape(BSe, D).astype(f32), BSe, Dp)
    mask2d = mask.astype(f32).reshape(BS, S)          # (B*S, S), 1=attend
    pe = _pad2d(params["pe"], S, Dp)                  # (S, Dp), resident

    wqkv = jnp.concatenate(
        [_pad2d(params["wq"], Dp, Dp),
         _pad2d(params["wk"], Dp, Dp),
         _pad2d(params["wv"], Dp, Dp)], axis=1).astype(bf16)     # (Dp, 3Dp)
    wcq = _pad2d(params["wcq"], Dp, Ap).astype(bf16)
    wckv = jnp.concatenate(
        [_pad2d(params["wck"], Dp, Ap),
         _pad2d(params["wcv"], Dp, Ap)], axis=1).astype(bf16)    # (Dp, 2Ap)
    wpv = _pad2d(params["wpv"], Ap, Dp).astype(bf16)
    bpv = _pad2d(params["bpv"], 1, Dp)
    w1 = _pad2d(params["w1"], Dp, Hp).astype(bf16)
    bf1 = _pad2d(params["bf1"], 1, Hp)
    w2 = _pad2d(params["w2"], Hp, Dp).astype(bf16)
    bf2 = _pad2d(params["bf2"], 1, Dp)

    def padg(p):  # gamma/beta -> (1, Dp); padded lanes are masked anyway
        return _pad2d(p, 1, Dp)

    g1, b1 = padg(params["g1"]), padg(params["b1"])
    g2, b2 = padg(params["g2"]), padg(params["b2"])
    g3, b3 = padg(params["g3"]), padg(params["b3"])

    operands = [x2d, enc2d, mask2d, pe,
                wqkv, g1, b1,
                wcq, wckv, wpv, bpv, g2, b2,
                w1, bf1, w2, bf2, g3, b3]

    # ---- BlockSpecs: per-batch rows for activations, resident weights ----
    def row_spec(rows, cols):
        return pl.BlockSpec((rows, cols), lambda b: (b, 0))

    def resident(shape):
        return pl.BlockSpec(shape, lambda b: (0,) * len(shape))

    in_specs = [
        row_spec(S, Dp),                 # x
        row_spec(Se, Dp),                # encoder output
        row_spec(S, S),                  # mask (full last dim)
        resident((S, Dp)),               # positional encoding
        resident((Dp, 3 * Dp)),          # wqkv
        resident((1, Dp)), resident((1, Dp)),          # g1, b1
        resident((Dp, Ap)),              # wcq
        resident((Dp, 2 * Ap)),          # wckv
        resident((Ap, Dp)),              # wpv
        resident((1, Dp)),               # bpv
        resident((1, Dp)), resident((1, Dp)),          # g2, b2
        resident((Dp, Hp)), resident((1, Hp)),         # w1, bf1
        resident((Hp, Dp)), resident((1, Dp)),         # w2, bf2
        resident((1, Dp)), resident((1, Dp)),          # g3, b3
    ]
    out_spec = row_spec(S, Dp)

    # ---- advisory cost estimate for the XLA scheduler ----
    flops = B * (2 * S * Dp * 3 * Dp          # fused self QKV
                 + 2 * S * S * Dp * 2         # self scores + prob @ V
                 + 2 * S * Dp * Ap            # cross Q
                 + 2 * Se * Dp * 2 * Ap       # fused cross K|V
                 + 2 * S * Se * Ap * 2        # cross scores + prob @ V
                 + 2 * S * Ap * Dp            # projectbacktovocab
                 + 2 * S * Dp * Hp            # FF1
                 + 2 * S * Hp * Dp)           # FF2
    transcendentals = B * (S * S + S * Se + 5 * S)
    bytes_accessed = int(sum(int(o.size) * o.dtype.itemsize for o in operands)
                         + BS * Dp * 4)
    cost = pl.CostEstimate(flops=int(flops),
                           transcendentals=int(transcendentals),
                           bytes_accessed=bytes_accessed)

    # TODO(synk): for a realistic tgt_vocab_size the (Dp,3Dp)/(Dp,Hp) weights
    # must additionally be tiled over K/N grid axes (256-multiples on v6e/v7x,
    # 128 on v5e) with an f32 accumulator scratch and vmem_limit_bytes sized
    # for v7x's 64 MiB VMEM; at these shapes everything fits whole in VMEM.
    kernel = functools.partial(decoder_layer_kernel, D, A)
    out2d = pl.pallas_call(
        kernel,
        out_shape=jax.ShapeDtypeStruct((BS, Dp), f32),
        grid_spec=pltpu.PrefetchScalarGridSpec(
            num_scalar_prefetch=0,
            grid=(B,),
            in_specs=in_specs,
            out_specs=out_spec,
        ),
        compiler_params=pltpu.CompilerParams(
            dimension_semantics=("parallel",),          # megacore on v7x
            vmem_limit_bytes=32 * 1024 * 1024),
        cost_estimate=cost,
    )(*operands)

    return out2d[:, :D].reshape(B, S, D)


# --------------------------- params & reference ----------------------------

def make_positional_encoding(S, D):
    pos = jnp.arange(S, dtype=jnp.float32)[:, None]
    i = jnp.arange(D, dtype=jnp.float32)[None, :]
    angle = pos / jnp.power(10000.0, (2.0 * jnp.floor(i / 2.0)) / D)
    pe = jnp.where((jnp.arange(D) % 2) == 0, jnp.sin(angle), jnp.cos(angle))
    return pe.astype(jnp.float32)


def make_params(key, D, A, H, S):
    ks = jax.random.split(key, 16)
    scale = 0.05

    def w(k, shape):
        return (scale * jax.random.normal(k, shape)).astype(jnp.float32)

    return {
        "pe": make_positional_encoding(S, D),
        "wq": w(ks[0], (D, D)), "wk": w(ks[1], (D, D)), "wv": w(ks[2], (D, D)),
        "g1": jnp.ones((1, D), jnp.float32), "b1": jnp.zeros((1, D), jnp.float32),
        "wcq": w(ks[3], (D, A)), "wck": w(ks[4], (D, A)), "wcv": w(ks[5], (D, A)),
        "wpv": w(ks[6], (A, D)), "bpv": w(ks[7], (1, D)),
        "g2": jnp.ones((1, D), jnp.float32), "b2": jnp.zeros((1, D), jnp.float32),
        "w1": w(ks[8], (D, H)), "bf1": w(ks[9], (1, H)),
        "w2": w(ks[10], (H, D)), "bf2": w(ks[11], (1, D)),
        "g3": jnp.ones((1, D), jnp.float32), "b3": jnp.zeros((1, D), jnp.float32),
    }


def _layernorm_ref(v, g, b, eps=1e-5):
    mu = jnp.mean(v, axis=-1, keepdims=True)
    var = jnp.mean((v - mu) ** 2, axis=-1, keepdims=True)
    return (v - mu) * lax.rsqrt(var + eps) * g + b


def reference(x, enc, mask, p):
    """Pure-JAX reference mirroring the PyTorch forward, using the same bf16
    MXU-operand casts (f32 accumulation) as the kernel."""
    D = x.shape[-1]
    A = p["wcq"].shape[-1]
    bf16 = jnp.bfloat16

    def bmm(eq, a, b):
        return jnp.einsum(eq, a.astype(bf16), b.astype(bf16),
                          preferred_element_type=jnp.float32)

    emb = x + p["pe"][None]
    q = _bdot(emb, p["wq"]); k = _bdot(emb, p["wk"]); v = _bdot(emb, p["wv"])
    s = bmm("bqd,bkd->bqk", q, k) / math.sqrt(D)
    s = jnp.where(mask > 0.0, s, -1e9)
    pr = jax.nn.softmax(s, axis=-1)
    attn = bmm("bqk,bkd->bqd", pr, v)
    x1 = _layernorm_ref(attn + emb, p["g1"], p["b1"])

    cq = _bdot(x1, p["wcq"]); ck = _bdot(enc, p["wck"]); cv = _bdot(enc, p["wcv"])
    cs = bmm("bqa,bka->bqk", cq, ck) / math.sqrt(A)
    cpr = jax.nn.softmax(cs, axis=-1)
    cattn = bmm("bqk,bka->bqa", cpr, cv)
    proj = _bdot(cattn, p["wpv"]) + p["bpv"]
    x2 = _layernorm_ref(x1 + proj, p["g2"], p["b2"])

    ff = _bdot(jnp.maximum(_bdot(x2, p["w1"]) + p["bf1"], 0.0), p["w2"]) + p["bf2"]
    return _layernorm_ref(x2 + ff, p["g3"], p["b3"])


if __name__ == "__main__":
    B, S, Se = 2, 8, 8
    D = 32          # tgt_vocab_size (working feature dim, per norm1/norm2/norm3)
    A = 16          # intermediate_attn_dim
    H = 64          # feed-forward hidden dim

    key = jax.random.PRNGKey(0)
    kx, ke, kp = jax.random.split(key, 3)
    x = jax.random.normal(kx, (B, S, D), dtype=jnp.float32)
    enc = jax.random.normal(ke, (B, Se, D), dtype=jnp.float32)
    # causal mask, broadcast over batch
    causal = jnp.tril(jnp.ones((S, S), jnp.float32))
    mask = jnp.broadcast_to(causal, (B, S, S))

    params = make_params(kp, D, A, H, S)

    out = jax.block_until_ready(decoder_layer(x, enc, mask, params))
    ref = jax.block_until_ready(reference(x, enc, mask, params))

    assert out.shape == (B, S, D)
    # bf16 MXU operands + approximate-reciprocal softmax -> compare at 2e-2.
    assert jnp.allclose(out, ref, rtol=2e-2, atol=2e-2), "mismatch vs JAX reference"
    print("KERNEL_OK")
</pallas_src>

<mosaic_0001>
module attributes {stable_mosaic.version = 11 : i64} {
  func.func @decoder_layer_kernel(%arg0: i32, %arg1: memref<8x128xf32, #tpu.memory_space<vmem>>, %arg2: memref<8x128xf32, #tpu.memory_space<vmem>>, %arg3: memref<8x8xf32, #tpu.memory_space<vmem>>, %arg4: memref<8x128xf32, #tpu.memory_space<vmem>>, %arg5: memref<128x384xbf16, #tpu.memory_space<vmem>>, %arg6: memref<1x128xf32, #tpu.memory_space<vmem>>, %arg7: memref<1x128xf32, #tpu.memory_space<vmem>>, %arg8: memref<128x128xbf16, #tpu.memory_space<vmem>>, %arg9: memref<128x256xbf16, #tpu.memory_space<vmem>>, %arg10: memref<128x128xbf16, #tpu.memory_space<vmem>>, %arg11: memref<1x128xf32, #tpu.memory_space<vmem>>, %arg12: memref<1x128xf32, #tpu.memory_space<vmem>>, %arg13: memref<1x128xf32, #tpu.memory_space<vmem>>, %arg14: memref<128x128xbf16, #tpu.memory_space<vmem>>, %arg15: memref<1x128xf32, #tpu.memory_space<vmem>>, %arg16: memref<128x128xbf16, #tpu.memory_space<vmem>>, %arg17: memref<1x128xf32, #tpu.memory_space<vmem>>, %arg18: memref<1x128xf32, #tpu.memory_space<vmem>>, %arg19: memref<1x128xf32, #tpu.memory_space<vmem>>, %arg20: memref<8x128xf32, #tpu.memory_space<vmem>>) attributes {dimension_semantics = [#tpu.dimension_semantics<parallel>], iteration_bounds = array<i64: 2>, scalar_prefetch = 0 : i64, scratch_operands = 0 : i64, tpu.core_type = #tpu.core_type<tc>, window_params = [{transform_indices = @transform_0, window_bounds = array<i64: 8, 128>}, {transform_indices = @transform_1, window_bounds = array<i64: 8, 128>}, {transform_indices = @transform_2, window_bounds = array<i64: 8, 8>}, {pipeline_mode = #tpu.pipeline_mode<synchronous>, transform_indices = @transform_3, window_bounds = array<i64: 8, 128>}, {pipeline_mode = #tpu.pipeline_mode<synchronous>, transform_indices = @transform_4, window_bounds = array<i64: 128, 384>}, {pipeline_mode = #tpu.pipeline_mode<synchronous>, transform_indices = @transform_5, window_bounds = array<i64: 1, 128>}, {pipeline_mode = #tpu.pipeline_mode<synchronous>, transform_indices = @transform_6, window_bounds = array<i64: 1, 128>}, {pipeline_mode = #tpu.pipeline_mode<synchronous>, transform_indices = @transform_7, window_bounds = array<i64: 128, 128>}, {pipeline_mode = #tpu.pipeline_mode<synchronous>, transform_indices = @transform_8, window_bounds = array<i64: 128, 256>}, {pipeline_mode = #tpu.pipeline_mode<synchronous>, transform_indices = @transform_9, window_bounds = array<i64: 128, 128>}, {pipeline_mode = #tpu.pipeline_mode<synchronous>, transform_indices = @transform_10, window_bounds = array<i64: 1, 128>}, {pipeline_mode = #tpu.pipeline_mode<synchronous>, transform_indices = @transform_11, window_bounds = array<i64: 1, 128>}, {pipeline_mode = #tpu.pipeline_mode<synchronous>, transform_indices = @transform_12, window_bounds = array<i64: 1, 128>}, {pipeline_mode = #tpu.pipeline_mode<synchronous>, transform_indices = @transform_13, window_bounds = array<i64: 128, 128>}, {pipeline_mode = #tpu.pipeline_mode<synchronous>, transform_indices = @transform_14, window_bounds = array<i64: 1, 128>}, {pipeline_mode = #tpu.pipeline_mode<synchronous>, transform_indices = @transform_15, window_bounds = array<i64: 128, 128>}, {pipeline_mode = #tpu.pipeline_mode<synchronous>, transform_indices = @transform_16, window_bounds = array<i64: 1, 128>}, {pipeline_mode = #tpu.pipeline_mode<synchronous>, transform_indices = @transform_17, window_bounds = array<i64: 1, 128>}, {pipeline_mode = #tpu.pipeline_mode<synchronous>, transform_indices = @transform_18, window_bounds = array<i64: 1, 128>}, {transform_indices = @transform_19, window_bounds = array<i64: 8, 128>}]} {
    %0 = tpu.iota {dimensions = array<i32: 1>} : vector<1x128xi32>
    %c32_i32 = arith.constant 32 : i32
    %1 = vector.broadcast %c32_i32 : i32 to vector<1x128xi32>
    %2 = arith.cmpi slt, %0, %1 : vector<1x128xi32>
    %c0 = arith.constant 0 : index
    %c0_0 = arith.constant 0 : index
    %3 = vector.load %arg1[%c0, %c0_0] : memref<8x128xf32, #tpu.memory_space<vmem>>, vector<8x128xf32>
    %c0_1 = arith.constant 0 : index
    %c0_2 = arith.constant 0 : index
    %4 = vector.load %arg2[%c0_1, %c0_2] : memref<8x128xf32, #tpu.memory_space<vmem>>, vector<8x128xf32>
    %c0_3 = arith.constant 0 : index
    %c0_4 = arith.constant 0 : index
    %5 = vector.load %arg4[%c0_3, %c0_4] : memref<8x128xf32, #tpu.memory_space<vmem>>, vector<8x128xf32>
    %6 = arith.addf %3, %5 : vector<8x128xf32>
    %c0_5 = arith.constant 0 : index
    %c0_6 = arith.constant 0 : index
    %7 = vector.load %arg5[%c0_5, %c0_6] : memref<128x384xbf16, #tpu.memory_space<vmem>>, vector<128x384xbf16>
    %8 = arith.truncf %6 : vector<8x128xf32> to vector<8x128xbf16>
    %cst = arith.constant dense<0.000000e+00> : vector<8x384xf32>
    %9 = tpu.matmul %8, %7, %cst {dimension_numbers = #tpu.dot_dimension_numbers<[1], [0], [0], [1], [0, 0, 1, 1], [], []>} : vector<8x128xbf16>, vector<128x384xbf16>, vector<8x384xf32> -> vector<8x384xf32>
    %10 = vector.extract_strided_slice %9 {offsets = [0, 0], sizes = [8, 128], strides = [1, 1]} : vector<8x384xf32> to vector<8x128xf32>
    %11 = vector.extract_strided_slice %9 {offsets = [0, 128], sizes = [8, 128], strides = [1, 1]} : vector<8x384xf32> to vector<8x128xf32>
    %12 = vector.extract_strided_slice %9 {offsets = [0, 256], sizes = [8, 128], strides = [1, 1]} : vector<8x384xf32> to vector<8x128xf32>
    %13 = arith.truncf %10 : vector<8x128xf32> to vector<8x128xbf16>
    %14 = arith.truncf %11 : vector<8x128xf32> to vector<8x128xbf16>
    %cst_7 = arith.constant dense<0.000000e+00> : vector<8x8xf32>
    %15 = tpu.matmul %13, %14, %cst_7 {dimension_numbers = #tpu.dot_dimension_numbers<[1], [1], [0], [0], [0, 0, 1, 0], [], []>} : vector<8x128xbf16>, vector<8x128xbf16>, vector<8x8xf32> -> vector<8x8xf32>
    %cst_8 = arith.constant 0.176776692 : f32
    %16 = vector.broadcast %cst_8 : f32 to vector<8x8xf32>
    %17 = arith.mulf %15, %16 : vector<8x8xf32>
    %c0_9 = arith.constant 0 : index
    %c0_10 = arith.constant 0 : index
    %18 = vector.load %arg3[%c0_9, %c0_10] : memref<8x8xf32, #tpu.memory_space<vmem>>, vector<8x8xf32>
    %cst_11 = arith.constant 0.000000e+00 : f32
    %19 = vector.broadcast %cst_11 : f32 to vector<8x8xf32>
    %20 = arith.cmpf ogt, %18, %19 : vector<8x8xf32>
    %cst_12 = arith.constant -1.000000e+09 : f32
    %21 = vector.broadcast %cst_12 : f32 to vector<8x8xf32>
    %22 = arith.select %20, %17, %21 : vector<8x8xi1>, vector<8x8xf32>
    %cst_13 = arith.constant dense<0xFF800000> : vector<8xf32>
    %23 = vector.multi_reduction <maximumf>, %22, %cst_13 [1] : vector<8x8xf32> to vector<8xf32>
    %24 = vector.shape_cast %23 : vector<8xf32> to vector<8x1xf32>
    %25 = vector.broadcast %24 : vector<8x1xf32> to vector<8x8xf32>
    %26 = arith.subf %22, %25 : vector<8x8xf32>
    %27 = math.exp %26 : vector<8x8xf32>
    %cst_14 = arith.constant dense<0.000000e+00> : vector<8xf32>
    %28 = vector.multi_reduction <add>, %27, %cst_14 [1] : vector<8x8xf32> to vector<8xf32>
    %29 = vector.shape_cast %28 : vector<8xf32> to vector<8x1xf32>
    %30 = tpu.reciprocal %29 {approx = true} : vector<8x1xf32> -> vector<8x1xf32>
    %31 = vector.broadcast %30 : vector<8x1xf32> to vector<8x8xf32>
    %32 = arith.mulf %27, %31 : vector<8x8xf32>
    %33 = arith.truncf %32 : vector<8x8xf32> to vector<8x8xbf16>
    %34 = arith.truncf %12 : vector<8x128xf32> to vector<8x128xbf16>
    %cst_15 = arith.constant dense<0.000000e+00> : vector<8x128xf32>
    %35 = tpu.matmul %33, %34, %cst_15 {dimension_numbers = #tpu.dot_dimension_numbers<[1], [0], [0], [1], [0, 0, 1, 1], [], []>} : vector<8x8xbf16>, vector<8x128xbf16>, vector<8x128xf32> -> vector<8x128xf32>
    %36 = arith.addf %35, %6 : vector<8x128xf32>
    %c0_16 = arith.constant 0 : index
    %c0_17 = arith.constant 0 : index
    %37 = vector.load %arg6[%c0_16, %c0_17] : memref<1x128xf32, #tpu.memory_space<vmem>>, vector<1x128xf32>
    %c0_18 = arith.constant 0 : index
    %c0_19 = arith.constant 0 : index
    %38 = vector.load %arg7[%c0_18, %c0_19] : memref<1x128xf32, #tpu.memory_space<vmem>>, vector<1x128xf32>
    %cst_20 = arith.constant dense<0.000000e+00> : vector<8xf32>
    %39 = vector.multi_reduction <add>, %36, %cst_20 [1] : vector<8x128xf32> to vector<8xf32>
    %40 = vector.shape_cast %39 : vector<8xf32> to vector<8x1xf32>
    %cst_21 = arith.constant 3.125000e-02 : f32
    %41 = vector.broadcast %cst_21 : f32 to vector<8x1xf32>
    %42 = arith.mulf %40, %41 : vector<8x1xf32>
    %43 = vector.broadcast %42 : vector<8x1xf32> to vector<8x128xf32>
    %44 = arith.subf %36, %43 : vector<8x128xf32>
    %cst_22 = arith.constant 0.000000e+00 : f32
    %45 = vector.shape_cast %2 : vector<1x128xi1> to vector<1x128xi1>
    %46 = vector.broadcast %45 : vector<1x128xi1> to vector<8x128xi1>
    %47 = vector.broadcast %cst_22 : f32 to vector<8x128xf32>
    %48 = arith.select %46, %44, %47 : vector<8x128xi1>, vector<8x128xf32>
    %49 = arith.mulf %48, %48 : vector<8x128xf32>
    %cst_23 = arith.constant dense<0.000000e+00> : vector<8xf32>
    %50 = vector.multi_reduction <add>, %49, %cst_23 [1] : vector<8x128xf32> to vector<8xf32>
    %51 = vector.shape_cast %50 : vector<8xf32> to vector<8x1xf32>
    %cst_24 = arith.constant 3.125000e-02 : f32
    %52 = vector.broadcast %cst_24 : f32 to vector<8x1xf32>
    %53 = arith.mulf %51, %52 : vector<8x1xf32>
    %cst_25 = arith.constant 9.99999974E-6 : f32
    %54 = vector.broadcast %cst_25 : f32 to vector<8x1xf32>
    %55 = arith.addf %53, %54 : vector<8x1xf32>
    %56 = math.rsqrt %55 : vector<8x1xf32>
    %57 = vector.broadcast %56 : vector<8x1xf32> to vector<8x128xf32>
    %58 = arith.mulf %48, %57 : vector<8x128xf32>
    %59 = vector.broadcast %37 : vector<1x128xf32> to vector<8x128xf32>
    %60 = arith.mulf %58, %59 : vector<8x128xf32>
    %61 = vector.broadcast %38 : vector<1x128xf32> to vector<8x128xf32>
    %62 = arith.addf %60, %61 : vector<8x128xf32>
    %c0_26 = arith.constant 0 : index
    %c0_27 = arith.constant 0 : index
    %63 = vector.load %arg8[%c0_26, %c0_27] : memref<128x128xbf16, #tpu.memory_space<vmem>>, vector<128x128xbf16>
    %64 = arith.truncf %62 : vector<8x128xf32> to vector<8x128xbf16>
    %cst_28 = arith.constant dense<0.000000e+00> : vector<8x128xf32>
    %65 = tpu.matmul %64, %63, %cst_28 {dimension_numbers = #tpu.dot_dimension_numbers<[1], [0], [0], [1], [0, 0, 1, 1], [], []>} : vector<8x128xbf16>, vector<128x128xbf16>, vector<8x128xf32> -> vector<8x128xf32>
    %c0_29 = arith.constant 0 : index
    %c0_30 = arith.constant 0 : index
    %66 = vector.load %arg9[%c0_29, %c0_30] : memref<128x256xbf16, #tpu.memory_space<vmem>>, vector<128x256xbf16>
    %67 = arith.truncf %4 : vector<8x128xf32> to vector<8x128xbf16>
    %cst_31 = arith.constant dense<0.000000e+00> : vector<8x256xf32>
    %68 = tpu.matmul %67, %66, %cst_31 {dimension_numbers = #tpu.dot_dimension_numbers<[1], [0], [0], [1], [0, 0, 1, 1], [], []>} : vector<8x128xbf16>, vector<128x256xbf16>, vector<8x256xf32> -> vector<8x256xf32>
    %69 = vector.extract_strided_slice %68 {offsets = [0, 0], sizes = [8, 128], strides = [1, 1]} : vector<8x256xf32> to vector<8x128xf32>
    %70 = vector.extract_strided_slice %68 {offsets = [0, 128], sizes = [8, 128], strides = [1, 1]} : vector<8x256xf32> to vector<8x128xf32>
    %71 = arith.truncf %65 : vector<8x128xf32> to vector<8x128xbf16>
    %72 = arith.truncf %69 : vector<8x128xf32> to vector<8x128xbf16>
    %cst_32 = arith.constant dense<0.000000e+00> : vector<8x8xf32>
    %73 = tpu.matmul %71, %72, %cst_32 {dimension_numbers = #tpu.dot_dimension_numbers<[1], [1], [0], [0], [0, 0, 1, 0], [], []>} : vector<8x128xbf16>, vector<8x128xbf16>, vector<8x8xf32> -> vector<8x8xf32>
    %cst_33 = arith.constant 2.500000e-01 : f32
    %74 = vector.broadcast %cst_33 : f32 to vector<8x8xf32>
    %75 = arith.mulf %73, %74 : vector<8x8xf32>
    %cst_34 = arith.constant dense<0xFF800000> : vector<8xf32>
    %76 = vector.multi_reduction <maximumf>, %75, %cst_34 [1] : vector<8x8xf32> to vector<8xf32>
    %77 = vector.shape_cast %76 : vector<8xf32> to vector<8x1xf32>
    %78 = vector.broadcast %77 : vector<8x1xf32> to vector<8x8xf32>
    %79 = arith.subf %75, %78 : vector<8x8xf32>
    %80 = math.exp %79 : vector<8x8xf32>
    %cst_35 = arith.constant dense<0.000000e+00> : vector<8xf32>
    %81 = vector.multi_reduction <add>, %80, %cst_35 [1] : vector<8x8xf32> to vector<8xf32>
    %82 = vector.shape_cast %81 : vector<8xf32> to vector<8x1xf32>
    %83 = tpu.reciprocal %82 {approx = true} : vector<8x1xf32> -> vector<8x1xf32>
    %84 = vector.broadcast %83 : vector<8x1xf32> to vector<8x8xf32>
    %85 = arith.mulf %80, %84 : vector<8x8xf32>
    %86 = arith.truncf %85 : vector<8x8xf32> to vector<8x8xbf16>
    %87 = arith.truncf %70 : vector<8x128xf32> to vector<8x128xbf16>
    %cst_36 = arith.constant dense<0.000000e+00> : vector<8x128xf32>
    %88 = tpu.matmul %86, %87, %cst_36 {dimension_numbers = #tpu.dot_dimension_numbers<[1], [0], [0], [1], [0, 0, 1, 1], [], []>} : vector<8x8xbf16>, vector<8x128xbf16>, vector<8x128xf32> -> vector<8x128xf32>
    %c0_37 = arith.constant 0 : index
    %c0_38 = arith.constant 0 : index
    %89 = vector.load %arg10[%c0_37, %c0_38] : memref<128x128xbf16, #tpu.memory_space<vmem>>, vector<128x128xbf16>
    %90 = arith.truncf %88 : vector<8x128xf32> to vector<8x128xbf16>
    %cst_39 = arith.constant dense<0.000000e+00> : vector<8x128xf32>
    %91 = tpu.matmul %90, %89, %cst_39 {dimension_numbers = #tpu.dot_dimension_numbers<[1], [0], [0], [1], [0, 0, 1, 1], [], []>} : vector<8x128xbf16>, vector<128x128xbf16>, vector<8x128xf32> -> vector<8x128xf32>
    %c0_40 = arith.constant 0 : index
    %c0_41 = arith.constant 0 : index
    %92 = vector.load %arg11[%c0_40, %c0_41] : memref<1x128xf32, #tpu.memory_space<vmem>>, vector<1x128xf32>
    %93 = vector.broadcast %92 : vector<1x128xf32> to vector<8x128xf32>
    %94 = arith.addf %91, %93 : vector<8x128xf32>
    %95 = arith.addf %62, %94 : vector<8x128xf32>
    %c0_42 = arith.constant 0 : index
    %c0_43 = arith.constant 0 : index
    %96 = vector.load %arg12[%c0_42, %c0_43] : memref<1x128xf32, #tpu.memory_space<vmem>>, vector<1x128xf32>
    %c0_44 = arith.constant 0 : index
    %c0_45 = arith.constant 0 : index
    %97 = vector.load %arg13[%c0_44, %c0_45] : memref<1x128xf32, #tpu.memory_space<vmem>>, vector<1x128xf32>
    %cst_46 = arith.constant dense<0.000000e+00> : vector<8xf32>
    %98 = vector.multi_reduction <add>, %95, %cst_46 [1] : vector<8x128xf32> to vector<8xf32>
    %99 = vector.shape_cast %98 : vector<8xf32> to vector<8x1xf32>
    %cst_47 = arith.constant 3.125000e-02 : f32
    %100 = vector.broadcast %cst_47 : f32 to vector<8x1xf32>
    %101 = arith.mulf %99, %100 : vector<8x1xf32>
    %102 = vector.broadcast %101 : vector<8x1xf32> to vector<8x128xf32>
    %103 = arith.subf %95, %102 : vector<8x128xf32>
    %cst_48 = arith.constant 0.000000e+00 : f32
    %104 = vector.shape_cast %2 : vector<1x128xi1> to vector<1x128xi1>
    %105 = vector.broadcast %104 : vector<1x128xi1> to vector<8x128xi1>
    %106 = vector.broadcast %cst_48 : f32 to vector<8x128xf32>
    %107 = arith.select %105, %103, %106 : vector<8x128xi1>, vector<8x128xf32>
    %108 = arith.mulf %107, %107 : vector<8x128xf32>
    %cst_49 = arith.constant dense<0.000000e+00> : vector<8xf32>
    %109 = vector.multi_reduction <add>, %108, %cst_49 [1] : vector<8x128xf32> to vector<8xf32>
    %110 = vector.shape_cast %109 : vector<8xf32> to vector<8x1xf32>
    %cst_50 = arith.constant 3.125000e-02 : f32
    %111 = vector.broadcast %cst_50 : f32 to vector<8x1xf32>
    %112 = arith.mulf %110, %111 : vector<8x1xf32>
    %cst_51 = arith.constant 9.99999974E-6 : f32
    %113 = vector.broadcast %cst_51 : f32 to vector<8x1xf32>
    %114 = arith.addf %112, %113 : vector<8x1xf32>
    %115 = math.rsqrt %114 : vector<8x1xf32>
    %116 = vector.broadcast %115 : vector<8x1xf32> to vector<8x128xf32>
    %117 = arith.mulf %107, %116 : vector<8x128xf32>
    %118 = vector.broadcast %96 : vector<1x128xf32> to vector<8x128xf32>
    %119 = arith.mulf %117, %118 : vector<8x128xf32>
    %120 = vector.broadcast %97 : vector<1x128xf32> to vector<8x128xf32>
    %121 = arith.addf %119, %120 : vector<8x128xf32>
    %c0_52 = arith.constant 0 : index
    %c0_53 = arith.constant 0 : index
    %122 = vector.load %arg14[%c0_52, %c0_53] : memref<128x128xbf16, #tpu.memory_space<vmem>>, vector<128x128xbf16>
    %123 = arith.truncf %121 : vector<8x128xf32> to vector<8x128xbf16>
    %cst_54 = arith.constant dense<0.000000e+00> : vector<8x128xf32>
    %124 = tpu.matmul %123, %122, %cst_54 {dimension_numbers = #tpu.dot_dimension_numbers<[1], [0], [0], [1], [0, 0, 1, 1], [], []>} : vector<8x128xbf16>, vector<128x128xbf16>, vector<8x128xf32> -> vector<8x128xf32>
    %c0_55 = arith.constant 0 : index
    %c0_56 = arith.constant 0 : index
    %125 = vector.load %arg15[%c0_55, %c0_56] : memref<1x128xf32, #tpu.memory_space<vmem>>, vector<1x128xf32>
    %126 = vector.broadcast %125 : vector<1x128xf32> to vector<8x128xf32>
    %127 = arith.addf %124, %126 : vector<8x128xf32>
    %cst_57 = arith.constant 0.000000e+00 : f32
    %128 = vector.broadcast %cst_57 : f32 to vector<8x128xf32>
    %129 = arith.maximumf %127, %128 : vector<8x128xf32>
    %c0_58 = arith.constant 0 : index
    %c0_59 = arith.constant 0 : index
    %130 = vector.load %arg16[%c0_58, %c0_59] : memref<128x128xbf16, #tpu.memory_space<vmem>>, vector<128x128xbf16>
    %131 = arith.truncf %129 : vector<8x128xf32> to vector<8x128xbf16>
    %cst_60 = arith.constant dense<0.000000e+00> : vector<8x128xf32>
    %132 = tpu.matmul %131, %130, %cst_60 {dimension_numbers = #tpu.dot_dimension_numbers<[1], [0], [0], [1], [0, 0, 1, 1], [], []>} : vector<8x128xbf16>, vector<128x128xbf16>, vector<8x128xf32> -> vector<8x128xf32>
    %c0_61 = arith.constant 0 : index
    %c0_62 = arith.constant 0 : index
    %133 = vector.load %arg17[%c0_61, %c0_62] : memref<1x128xf32, #tpu.memory_space<vmem>>, vector<1x128xf32>
    %134 = vector.broadcast %133 : vector<1x128xf32> to vector<8x128xf32>
    %135 = arith.addf %132, %134 : vector<8x128xf32>
    %136 = arith.addf %121, %135 : vector<8x128xf32>
    %c0_63 = arith.constant 0 : index
    %c0_64 = arith.constant 0 : index
    %137 = vector.load %arg18[%c0_63, %c0_64] : memref<1x128xf32, #tpu.memory_space<vmem>>, vector<1x128xf32>
    %c0_65 = arith.constant 0 : index
    %c0_66 = arith.constant 0 : index
    %138 = vector.load %arg19[%c0_65, %c0_66] : memref<1x128xf32, #tpu.memory_space<vmem>>, vector<1x128xf32>
    %cst_67 = arith.constant dense<0.000000e+00> : vector<8xf32>
    %139 = vector.multi_reduction <add>, %136, %cst_67 [1] : vector<8x128xf32> to vector<8xf32>
    %140 = vector.shape_cast %139 : vector<8xf32> to vector<8x1xf32>
    %cst_68 = arith.constant 3.125000e-02 : f32
    %141 = vector.broadcast %cst_68 : f32 to vector<8x1xf32>
    %142 = arith.mulf %140, %141 : vector<8x1xf32>
    %143 = vector.broadcast %142 : vector<8x1xf32> to vector<8x128xf32>
    %144 = arith.subf %136, %143 : vector<8x128xf32>
    %cst_69 = arith.constant 0.000000e+00 : f32
    %145 = vector.shape_cast %2 : vector<1x128xi1> to vector<1x128xi1>
    %146 = vector.broadcast %145 : vector<1x128xi1> to vector<8x128xi1>
    %147 = vector.broadcast %cst_69 : f32 to vector<8x128xf32>
    %148 = arith.select %146, %144, %147 : vector<8x128xi1>, vector<8x128xf32>
    %149 = arith.mulf %148, %148 : vector<8x128xf32>
    %cst_70 = arith.constant dense<0.000000e+00> : vector<8xf32>
    %150 = vector.multi_reduction <add>, %149, %cst_70 [1] : vector<8x128xf32> to vector<8xf32>
    %151 = vector.shape_cast %150 : vector<8xf32> to vector<8x1xf32>
    %cst_71 = arith.constant 3.125000e-02 : f32
    %152 = vector.broadcast %cst_71 : f32 to vector<8x1xf32>
    %153 = arith.mulf %151, %152 : vector<8x1xf32>
    %cst_72 = arith.constant 9.99999974E-6 : f32
    %154 = vector.broadcast %cst_72 : f32 to vector<8x1xf32>
    %155 = arith.addf %153, %154 : vector<8x1xf32>
    %156 = math.rsqrt %155 : vector<8x1xf32>
    %157 = vector.broadcast %156 : vector<8x1xf32> to vector<8x128xf32>
    %158 = arith.mulf %148, %157 : vector<8x128xf32>
    %159 = vector.broadcast %137 : vector<1x128xf32> to vector<8x128xf32>
    %160 = arith.mulf %158, %159 : vector<8x128xf32>
    %161 = vector.broadcast %138 : vector<1x128xf32> to vector<8x128xf32>
    %162 = arith.addf %160, %161 : vector<8x128xf32>
    %c0_73 = arith.constant 0 : index
    %c0_74 = arith.constant 0 : index
    %163 = vector.load %arg20[%c0_73, %c0_74] : memref<8x128xf32, #tpu.memory_space<vmem>>, vector<8x128xf32>
    tpu.vector_store %arg20[%c0_73, %c0_74], %162 {strides = array<i32>} : memref<8x128xf32, #tpu.memory_space<vmem>>, vector<8x128xf32>,
    return
  }
  func.func @transform_0(%arg0: i32) -> (i32, i32) {
    %c0_i32 = arith.constant 0 : i32
    %c0_i32_0 = arith.constant 0 : i32
    return %arg0, %c0_i32 : i32, i32
  }
  func.func @transform_1(%arg0: i32) -> (i32, i32) {
    %c0_i32 = arith.constant 0 : i32
    %c0_i32_0 = arith.constant 0 : i32
    return %arg0, %c0_i32 : i32, i32
  }
  func.func @transform_2(%arg0: i32) -> (i32, i32) {
    %c0_i32 = arith.constant 0 : i32
    %c0_i32_0 = arith.constant 0 : i32
    return %arg0, %c0_i32 : i32, i32
  }
  func.func @transform_3(%arg0: i32) -> (i32, i32) {
    %c0_i32 = arith.constant 0 : i32
    %c0_i32_0 = arith.constant 0 : i32
    %c0_i32_1 = arith.constant 0 : i32
    return %c0_i32, %c0_i32_0 : i32, i32
  }
  func.func @transform_4(%arg0: i32) -> (i32, i32) {
    %c0_i32 = arith.constant 0 : i32
    %c0_i32_0 = arith.constant 0 : i32
    %c0_i32_1 = arith.constant 0 : i32
    return %c0_i32, %c0_i32_0 : i32, i32
  }
  func.func @transform_5(%arg0: i32) -> (i32, i32) {
    %c0_i32 = arith.constant 0 : i32
    %c0_i32_0 = arith.constant 0 : i32
    %c0_i32_1 = arith.constant 0 : i32
    return %c0_i32, %c0_i32_0 : i32, i32
  }
  func.func @transform_6(%arg0: i32) -> (i32, i32) {
    %c0_i32 = arith.constant 0 : i32
    %c0_i32_0 = arith.constant 0 : i32
    %c0_i32_1 = arith.constant 0 : i32
    return %c0_i32, %c0_i32_0 : i32, i32
  }
  func.func @transform_7(%arg0: i32) -> (i32, i32) {
    %c0_i32 = arith.constant 0 : i32
    %c0_i32_0 = arith.constant 0 : i32
    %c0_i32_1 = arith.constant 0 : i32
    return %c0_i32, %c0_i32_0 : i32, i32
  }
  func.func @transform_8(%arg0: i32) -> (i32, i32) {
    %c0_i32 = arith.constant 0 : i32
    %c0_i32_0 = arith.constant 0 : i32
    %c0_i32_1 = arith.constant 0 : i32
    return %c0_i32, %c0_i32_0 : i32, i32
  }
  func.func @transform_9(%arg0: i32) -> (i32, i32) {
    %c0_i32 = arith.constant 0 : i32
    %c0_i32_0 = arith.constant 0 : i32
    %c0_i32_1 = arith.constant 0 : i32
    return %c0_i32, %c0_i32_0 : i32, i32
  }
  func.func @transform_10(%arg0: i32) -> (i32, i32) {
    %c0_i32 = arith.constant 0 : i32
    %c0_i32_0 = arith.constant 0 : i32
    %c0_i32_1 = arith.constant 0 : i32
    return %c0_i32, %c0_i32_0 : i32, i32
  }
  func.func @transform_11(%arg0: i32) -> (i32, i32) {
    %c0_i32 = arith.constant 0 : i32
    %c0_i32_0 = arith.constant 0 : i32
    %c0_i32_1 = arith.constant 0 : i32
    return %c0_i32, %c0_i32_0 : i32, i32
  }
  func.func @transform_12(%arg0: i32) -> (i32, i32) {
    %c0_i32 = arith.constant 0 : i32
    %c0_i32_0 = arith.constant 0 : i32
    %c0_i32_1 = arith.constant 0 : i32
    return %c0_i32, %c0_i32_0 : i32, i32
  }
  func.func @transform_13(%arg0: i32) -> (i32, i32) {
    %c0_i32 = arith.constant 0 : i32
    %c0_i32_0 = arith.constant 0 : i32
    %c0_i32_1 = arith.constant 0 : i32
    return %c0_i32, %c0_i32_0 : i32, i32
  }
  func.func @transform_14(%arg0: i32) -> (i32, i32) {
    %c0_i32 = arith.constant 0 : i32
    %c0_i32_0 = arith.constant 0 : i32
    %c0_i32_1 = arith.constant 0 : i32
    return %c0_i32, %c0_i32_0 : i32, i32
  }
  func.func @transform_15(%arg0: i32) -> (i32, i32) {
    %c0_i32 = arith.constant 0 : i32
    %c0_i32_0 = arith.constant 0 : i32
    %c0_i32_1 = arith.constant 0 : i32
    return %c0_i32, %c0_i32_0 : i32, i32
  }
  func.func @transform_16(%arg0: i32) -> (i32, i32) {
    %c0_i32 = arith.constant 0 : i32
    %c0_i32_0 = arith.constant 0 : i32
    %c0_i32_1 = arith.constant 0 : i32
    return %c0_i32, %c0_i32_0 : i32, i32
  }
  func.func @transform_17(%arg0: i32) -> (i32, i32) {
    %c0_i32 = arith.constant 0 : i32
    %c0_i32_0 = arith.constant 0 : i32
    %c0_i32_1 = arith.constant 0 : i32
    return %c0_i32, %c0_i32_0 : i32, i32
  }
  func.func @transform_18(%arg0: i32) -> (i32, i32) {
    %c0_i32 = arith.constant 0 : i32
    %c0_i32_0 = arith.constant 0 : i32
    %c0_i32_1 = arith.constant 0 : i32
    return %c0_i32, %c0_i32_0 : i32, i32
  }
  func.func @transform_19(%arg0: i32) -> (i32, i32) {
    %c0_i32 = arith.constant 0 : i32
    %c0_i32_0 = arith.constant 0 : i32
    return %arg0, %c0_i32 : i32, i32
  }
}

</mosaic_0001>

<llo_original>
// kernel: tpu_custom_call.1
$region0: #{tpu_custom_call.1}
  #allocation0 [shape = 'u32[]', space=smem, size = 0x4, offset = 0x4, fixed_abs, tag = 'smem constant byte address 0x4 - core index']
  #allocation1 [shape = 'u32[144,128]{1,0:T(1,128)}', space=vmem, size = 0x12000, scoped, tag = 'internal scratch']
  %s0 = inlined_call_operand.hbm [shape: f32[16,128], index: 0, kind: input, shape index: {}]
  %s1 = inlined_call_operand.hbm [shape: f32[16,128], index: 1, kind: input, shape index: {}]
  %s2 = inlined_call_operand.vmem [shape: f32[16,8], index: 2, kind: input, shape index: {}]
  %s3 = inlined_call_operand.vmem [shape: f32[8,128], index: 3, kind: input, shape index: {}]
  %s4 = inlined_call_operand.hbm [shape: bf16[128,384], index: 4, kind: input, shape index: {}]
  %s5 = inlined_call_operand.vmem [shape: f32[1,128], index: 5, kind: input, shape index: {}]
  %s6 = inlined_call_operand.hbm [shape: f32[1,128], index: 6, kind: input, shape index: {}]
  %s7 = inlined_call_operand.hbm [shape: bf16[128,128], index: 7, kind: input, shape index: {}]
  %s8 = inlined_call_operand.hbm [shape: bf16[128,256], index: 8, kind: input, shape index: {}]
  %s9 = inlined_call_operand.hbm [shape: bf16[128,128], index: 9, kind: input, shape index: {}]
  %s10 = inlined_call_operand.hbm [shape: f32[1,128], index: 10, kind: input, shape index: {}]
  %s11 = inlined_call_operand.hbm [shape: f32[1,128], index: 11, kind: input, shape index: {}]
  %s12 = inlined_call_operand.hbm [shape: f32[1,128], index: 12, kind: input, shape index: {}]
  %s13 = inlined_call_operand.vmem [shape: bf16[128,128], index: 13, kind: input, shape index: {}]
  %s14 = inlined_call_operand.vmem [shape: f32[1,128], index: 14, kind: input, shape index: {}]
  %s15 = inlined_call_operand.hbm [shape: bf16[128,128], index: 15, kind: input, shape index: {}]
  %s16 = inlined_call_operand.vmem [shape: f32[1,128], index: 16, kind: input, shape index: {}]
  %s17 = inlined_call_operand.vmem [shape: f32[1,128], index: 17, kind: input, shape index: {}]
  %s18 = inlined_call_operand.vmem [shape: f32[1,128], index: 18, kind: input, shape index: {}]
  %s19 = inlined_call_operand.hbm [shape: f32[16,128], index: 19, kind: output, shape index: {}]
  %s20 = sld [smem:[#allocation0]]
  $region153: #{tpu_custom_call.1} parent=0
    _
  %s22 = ssub.s32 1, %s20
  %s23 = scalar_select 0, %s22, %s20
  $region1: #{tpu_custom_call.1} parent=0
    #allocation2 [shape = 'u8[8192]{0}', space=vmem, size = 0x2000, scoped, tag = 'input window, operand 0']
    #allocation3 [shape = 's32[2]{0}', space=sflag, size = 0x8, scoped, tag = 'scoped memory for tpu_custom_call.1']
    #allocation4 [shape = 's32[2]{0}', space=sflag, size = 0x8, scoped, tag = 'scoped memory for tpu_custom_call.1']
    #allocation5 [shape = 'u8[8192]{0}', space=vmem, size = 0x2000, scoped, tag = 'input window, operand 1']
    #allocation6 [shape = 's32[2]{0}', space=sflag, size = 0x8, scoped, tag = 'scoped memory for tpu_custom_call.1']
    #allocation7 [shape = 'u8[98304]{0}', space=vmem, size = 0x18000, scoped, tag = 'input window, operand 4, single buffered']
    #allocation8 [shape = 'u8[512]{0}', space=vmem, size = 0x400, scoped, tag = 'input window, operand 6, single buffered']
    #allocation9 [shape = 's32[1]{0}', space=sflag, size = 0x4, scoped, tag = 'scoped memory for tpu_custom_call.1']
    #allocation10 [shape = 'u8[32768]{0}', space=vmem, size = 0x8000, scoped, tag = 'input window, operand 7, single buffered']
    #allocation11 [shape = 'u8[65536]{0}', space=vmem, size = 0x10000, scoped, tag = 'input window, operand 8, single buffered']
    #allocation12 [shape = 's32[1]{0}', space=sflag, size = 0x4, scoped, tag = 'scoped memory for tpu_custom_call.1']
    #allocation13 [shape = 'u8[32768]{0}', space=vmem, size = 0x8000, scoped, tag = 'input window, operand 9, single buffered']
    #allocation14 [shape = 'u8[512]{0}', space=vmem, size = 0x400, scoped, tag = 'input window, operand 10, single buffered']
    #allocation15 [shape = 's32[1]{0}', space=sflag, size = 0x4, scoped, tag = 'scoped memory for tpu_custom_call.1']
    #allocation16 [shape = 'u8[512]{0}', space=vmem, size = 0x400, scoped, tag = 'input window, operand 11, single buffered']
    #allocation17 [shape = 'u8[512]{0}', space=vmem, size = 0x400, scoped, tag = 'input window, operand 12, single buffered']
    #allocation18 [shape = 's32[1]{0}', space=sflag, size = 0x4, scoped, tag = 'scoped memory for tpu_custom_call.1']
    #allocation19 [shape = 'u8[32768]{0}', space=vmem, size = 0x8000, scoped, tag = 'input window, operand 15, single buffered']
    #allocation20 [shape = 'u8[8192]{0}', space=vmem, size = 0x2000, scoped, tag = 'output window, operand 0']
    %24 = vsyncpa [#allocation3], 0
    %s25 = scalar_lea.sflag [#allocation3], 1
    %26 = vsyncpa %s25, 0
    %27 = vsyncpa [#allocation6], 0
    %s28 = scalar_lea.sflag [#allocation6], 1
    %29 = vsyncpa %s28, 0
    %30 = vsyncpa [#allocation9], 0
    %31 = vsyncpa [#allocation12], 0
    %32 = vsyncpa [#allocation15], 0
    %33 = vsyncpa [#allocation18], 0
    %34 = vsyncpa [#allocation4], 0
    %s35 = scalar_lea.sflag [#allocation4], 1
    %36 = vsyncpa %s35, 0
    loop: start=0, step=1, limit=4
    $region2: #{tpu_custom_call.1} parent=1 // loop_pre_header
      _
    $region3: #{tpu_custom_call.1} parent=1 // loop_header
      %s38 = sphi 0, %s42
      %p39 = scmp.ge.s32.totalorder %s38, 4
      %s48 = sphi 0, %s50
      %s51 = sphi 0, %s48
      %s52 = sphi 0, %s51
      %s68 = sphi 0, %s52
      %s74 = sphi 0, %s76
      %s77 = sphi 0, %s74
      %s78 = sphi 0, %s77
      %s94 = sphi 0, %s78
      %s100 = sphi 0, %s102
      %s103 = sphi 0, %s100
      %s104 = sphi 0, %s103
      %s120 = sphi 0, %s104
      %s124 = sphi 0, %s124
      %s126 = sphi 0, %s124
      %s127 = sphi 0, %s126
      %s141 = sphi 0, %s127
      %s145 = sphi 0, %s145
      %s147 = sphi 0, %s145
      %s148 = sphi 0, %s147
      %s162 = sphi 0, %s148
      %s166 = sphi 0, %s166
      %s168 = sphi 0, %s166
      %s169 = sphi 0, %s168
      %s183 = sphi 0, %s169
      %s187 = sphi 0, %s187
      %s189 = sphi 0, %s187
      %s190 = sphi 0, %s189
      %s204 = sphi 0, %s190
      %s208 = sphi 0, %s208
      %s210 = sphi 0, %s208
      %s211 = sphi 0, %s210
      %s225 = sphi 0, %s211
      %s229 = sphi 0, %s229
      %s231 = sphi 0, %s229
      %s232 = sphi 0, %s231
      %s246 = sphi 0, %s232
      %s250 = sphi 0, %s250
      %s252 = sphi 0, %s250
      %s253 = sphi 0, %s252
      %s267 = sphi 0, %s253
      %s271 = sphi 0, %s271
      %s273 = sphi 0, %s271
      %s274 = sphi 0, %s273
      %s288 = sphi 0, %s274
      %s292 = sphi 0, %s292
      %s294 = sphi 0, %s292
      %s295 = sphi 0, %s294
      %s309 = sphi 0, %s295
      %s313 = sphi 0, %s313
      %s315 = sphi 0, %s313
      %s316 = sphi 0, %s315
      %s330 = sphi 0, %s316
      %s334 = sphi 0, %s334
      %s336 = sphi 0, %s334
      %s337 = sphi 0, %s336
      %s351 = sphi 0, %s337
      %s355 = sphi 0, %s355
      %s357 = sphi 0, %s355
      %s358 = sphi 0, %s357
      %s372 = sphi 0, %s358
      %s376 = sphi 0, %s376
      %s378 = sphi 0, %s376
      %s379 = sphi 0, %s378
      %s393 = sphi 0, %s379
      %s397 = sphi 0, %s397
      %s399 = sphi 0, %s397
      %s400 = sphi 0, %s399
      %s414 = sphi 0, %s400
      %s418 = sphi 0, %s418
      %s420 = sphi 0, %s418
      %s421 = sphi 0, %s420
      %s435 = sphi 0, %s421
      %s439 = sphi 0, %s439
      %s441 = sphi 0, %s439
      %s442 = sphi 0, %s441
      %s456 = sphi 0, %s442
      %s462 = sphi 0, %s464
      %s465 = sphi 0, %s462
      %s466 = sphi 0, %s465
      %s482 = sphi 0, %s466
    $region4: #{tpu_custom_call.1} parent=1 // loop_header_branch
      %41 = sbr.rel (%p39) target = $region8
    $region5: #{tpu_custom_call.1} parent=1 // loop_body
      %s43 = ssub.s32 %s38, 1
      %s44 = ssub.s32 %s38, 2
      %s45 = sadd.s32 %s38, 1
      %s46 = ssub.s32 %s38, %s45
      %p47 = scmp.eq.s32.totalorder %s46, 0
      %s49 = sadd.s32 %s48, 1
      %s50 = scalar_select %p47, %s48, %s49
      %p53 = pneg %p47
      %p54 = scmp.eq.s32.totalorder %s38, 1
      %p55 = por %p53, %p54
      %p56 = scmp.ne.s32.totalorder %s48, %s51
      %p57 = scmp.eq.s32.totalorder %s38, 0
      %p58 = por %p56, %p57
      %p59 = scmp.ne.s32.totalorder %s48, %s51
      %p60 = scmp.eq.s32.totalorder %s43, 1
      %p61 = por %p59, %p60
      %p62 = scmp.ne.s32.totalorder %s51, %s52
      %p63 = scmp.eq.s32.totalorder %s43, 0
      %p64 = por %p62, %p63
      %p65 = scmp.ne.s32.totalorder %s51, %s52
      %p66 = scmp.eq.s32.totalorder %s44, 1
      %p67 = por %p65, %p66
      %p69 = scmp.ne.s32.totalorder %s52, %s68
      %p70 = scmp.eq.s32.totalorder %s44, 0
      %p71 = por %p69, %p70
      %s72 = ssub.s32 %s38, %s45
      %p73 = scmp.eq.s32.totalorder %s72, 0
      %s75 = sadd.s32 %s74, 1
      %s76 = scalar_select %p73, %s74, %s75
      %p79 = pneg %p73
      %p80 = scmp.eq.s32.totalorder %s38, 1
      %p81 = por %p79, %p80
      %p82 = scmp.ne.s32.totalorder %s74, %s77
      %p83 = scmp.eq.s32.totalorder %s38, 0
      %p84 = por %p82, %p83
      %p85 = scmp.ne.s32.totalorder %s74, %s77
      %p86 = scmp.eq.s32.totalorder %s43, 1
      %p87 = por %p85, %p86
      %p88 = scmp.ne.s32.totalorder %s77, %s78
      %p89 = scmp.eq.s32.totalorder %s43, 0
      %p90 = por %p88, %p89
      %p91 = scmp.ne.s32.totalorder %s77, %s78
      %p92 = scmp.eq.s32.totalorder %s44, 1
      %p93 = por %p91, %p92
      %p95 = scmp.ne.s32.totalorder %s78, %s94
      %p96 = scmp.eq.s32.totalorder %s44, 0
      %p97 = por %p95, %p96
      %s98 = ssub.s32 %s38, %s45
      %p99 = scmp.eq.s32.totalorder %s98, 0
      %s101 = sadd.s32 %s100, 1
      %s102 = scalar_select %p99, %s100, %s101
      %p105 = pneg %p99
      %p106 = scmp.eq.s32.totalorder %s38, 1
      %p107 = por %p105, %p106
      %p108 = scmp.ne.s32.totalorder %s100, %s103
      %p109 = scmp.eq.s32.totalorder %s38, 0
      %p110 = por %p108, %p109
      %p111 = scmp.ne.s32.totalorder %s100, %s103
      %p112 = scmp.eq.s32.totalorder %s43, 1
      %p113 = por %p111, %p112
      %p114 = scmp.ne.s32.totalorder %s103, %s104
      %p115 = scmp.eq.s32.totalorder %s43, 0
      %p116 = por %p114, %p115
      %p117 = scmp.ne.s32.totalorder %s103, %s104
      %p118 = scmp.eq.s32.totalorder %s44, 1
      %p119 = por %p117, %p118
      %p121 = scmp.ne.s32.totalorder %s104, %s120
      %p122 = scmp.eq.s32.totalorder %s44, 0
      %p123 = por %p121, %p122
      %s125 = sadd.s32 %s124, 1
      %p128 = scmp.eq.s32.totalorder %s38, 1
      %p129 = scmp.ne.s32.totalorder %s124, %s126
      %p130 = scmp.eq.s32.totalorder %s38, 0
      %p131 = por %p129, %p130
      %p132 = scmp.ne.s32.totalorder %s124, %s126
      %p133 = scmp.eq.s32.totalorder %s43, 1
      %p134 = por %p132, %p133
      %p135 = scmp.ne.s32.totalorder %s126, %s127
      %p136 = scmp.eq.s32.totalorder %s43, 0
      %p137 = por %p135, %p136
      %p138 = scmp.ne.s32.totalorder %s126, %s127
      %p139 = scmp.eq.s32.totalorder %s44, 1
      %p140 = por %p138, %p139
      %p142 = scmp.ne.s32.totalorder %s127, %s141
      %p143 = scmp.eq.s32.totalorder %s44, 0
      %p144 = por %p142, %p143
      %s146 = sadd.s32 %s145, 1
      %p149 = scmp.eq.s32.totalorder %s38, 1
      %p150 = scmp.ne.s32.totalorder %s145, %s147
      %p151 = scmp.eq.s32.totalorder %s38, 0
      %p152 = por %p150, %p151
      %p153 = scmp.ne.s32.totalorder %s145, %s147
      %p154 = scmp.eq.s32.totalorder %s43, 1
      %p155 = por %p153, %p154
      %p156 = scmp.ne.s32.totalorder %s147, %s148
      %p157 = scmp.eq.s32.totalorder %s43, 0
      %p158 = por %p156, %p157
      %p159 = scmp.ne.s32.totalorder %s147, %s148
      %p160 = scmp.eq.s32.totalorder %s44, 1
      %p161 = por %p159, %p160
      %p163 = scmp.ne.s32.totalorder %s148, %s162
      %p164 = scmp.eq.s32.totalorder %s44, 0
      %p165 = por %p163, %p164
      %s167 = sadd.s32 %s166, 1
      %p170 = scmp.eq.s32.totalorder %s38, 1
      %p171 = scmp.ne.s32.totalorder %s166, %s168
      %p172 = scmp.eq.s32.totalorder %s38, 0
      %p173 = por %p171, %p172
      %p174 = scmp.ne.s32.totalorder %s166, %s168
      %p175 = scmp.eq.s32.totalorder %s43, 1
      %p176 = por %p174, %p175
      %p177 = scmp.ne.s32.totalorder %s168, %s169
      %p178 = scmp.eq.s32.totalorder %s43, 0
      %p179 = por %p177, %p178
      %p180 = scmp.ne.s32.totalorder %s168, %s169
      %p181 = scmp.eq.s32.totalorder %s44, 1
      %p182 = por %p180, %p181
      %p184 = scmp.ne.s32.totalorder %s169, %s183
      %p185 = scmp.eq.s32.totalorder %s44, 0
      %p186 = por %p184, %p185
      %s188 = sadd.s32 %s187, 1
      %p191 = scmp.eq.s32.totalorder %s38, 1
      %p192 = scmp.ne.s32.totalorder %s187, %s189
      %p193 = scmp.eq.s32.totalorder %s38, 0
      %p194 = por %p192, %p193
      %p195 = scmp.ne.s32.totalorder %s187, %s189
      %p196 = scmp.eq.s32.totalorder %s43, 1
      %p197 = por %p195, %p196
      %p198 = scmp.ne.s32.totalorder %s189, %s190
      %p199 = scmp.eq.s32.totalorder %s43, 0
      %p200 = por %p198, %p199
      %p201 = scmp.ne.s32.totalorder %s189, %s190
      %p202 = scmp.eq.s32.totalorder %s44, 1
      %p203 = por %p201, %p202
      %p205 = scmp.ne.s32.totalorder %s190, %s204
      %p206 = scmp.eq.s32.totalorder %s44, 0
      %p207 = por %p205, %p206
      %s209 = sadd.s32 %s208, 1
      %p212 = scmp.eq.s32.totalorder %s38, 1
      %p213 = scmp.ne.s32.totalorder %s208, %s210
      %p214 = scmp.eq.s32.totalorder %s38, 0
      %p215 = por %p213, %p214
      %p216 = scmp.ne.s32.totalorder %s208, %s210
      %p217 = scmp.eq.s32.totalorder %s43, 1
      %p218 = por %p216, %p217
      %p219 = scmp.ne.s32.totalorder %s210, %s211
      %p220 = scmp.eq.s32.totalorder %s43, 0
      %p221 = por %p219, %p220
      %p222 = scmp.ne.s32.totalorder %s210, %s211
      %p223 = scmp.eq.s32.totalorder %s44, 1
      %p224 = por %p222, %p223
      %p226 = scmp.ne.s32.totalorder %s211, %s225
      %p227 = scmp.eq.s32.totalorder %s44, 0
      %p228 = por %p226, %p227
      %s230 = sadd.s32 %s229, 1
      %p233 = scmp.eq.s32.totalorder %s38, 1
      %p234 = scmp.ne.s32.totalorder %s229, %s231
      %p235 = scmp.eq.s32.totalorder %s38, 0
      %p236 = por %p234, %p235
      %p237 = scmp.ne.s32.totalorder %s229, %s231
      %p238 = scmp.eq.s32.totalorder %s43, 1
      %p239 = por %p237, %p238
      %p240 = scmp.ne.s32.totalorder %s231, %s232
      %p241 = scmp.eq.s32.totalorder %s43, 0
      %p242 = por %p240, %p241
      %p243 = scmp.ne.s32.totalorder %s231, %s232
      %p244 = scmp.eq.s32.totalorder %s44, 1
      %p245 = por %p243, %p244
      %p247 = scmp.ne.s32.totalorder %s232, %s246
      %p248 = scmp.eq.s32.totalorder %s44, 0
      %p249 = por %p247, %p248
      %s251 = sadd.s32 %s250, 1
      %p254 = scmp.eq.s32.totalorder %s38, 1
      %p255 = scmp.ne.s32.totalorder %s250, %s252
      %p256 = scmp.eq.s32.totalorder %s38, 0
      %p257 = por %p255, %p256
      %p258 = scmp.ne.s32.totalorder %s250, %s252
      %p259 = scmp.eq.s32.totalorder %s43, 1
      %p260 = por %p258, %p259
      %p261 = scmp.ne.s32.totalorder %s252, %s253
      %p262 = scmp.eq.s32.totalorder %s43, 0
      %p263 = por %p261, %p262
      %p264 = scmp.ne.s32.totalorder %s252, %s253
      %p265 = scmp.eq.s32.totalorder %s44, 1
      %p266 = por %p264, %p265
      %p268 = scmp.ne.s32.totalorder %s253, %s267
      %p269 = scmp.eq.s32.totalorder %s44, 0
      %p270 = por %p268, %p269
      %s272 = sadd.s32 %s271, 1
      %p275 = scmp.eq.s32.totalorder %s38, 1
      %p276 = scmp.ne.s32.totalorder %s271, %s273
      %p277 = scmp.eq.s32.totalorder %s38, 0
      %p278 = por %p276, %p277
      %p279 = scmp.ne.s32.totalorder %s271, %s273
      %p280 = scmp.eq.s32.totalorder %s43, 1
      %p281 = por %p279, %p280
      %p282 = scmp.ne.s32.totalorder %s273, %s274
      %p283 = scmp.eq.s32.totalorder %s43, 0
      %p284 = por %p282, %p283
      %p285 = scmp.ne.s32.totalorder %s273, %s274
      %p286 = scmp.eq.s32.totalorder %s44, 1
      %p287 = por %p285, %p286
      %p289 = scmp.ne.s32.totalorder %s274, %s288
      %p290 = scmp.eq.s32.totalorder %s44, 0
      %p291 = por %p289, %p290
      %s293 = sadd.s32 %s292, 1
      %p296 = scmp.eq.s32.totalorder %s38, 1
      %p297 = scmp.ne.s32.totalorder %s292, %s294
      %p298 = scmp.eq.s32.totalorder %s38, 0
      %p299 = por %p297, %p298
      %p300 = scmp.ne.s32.totalorder %s292, %s294
      %p301 = scmp.eq.s32.totalorder %s43, 1
      %p302 = por %p300, %p301
      %p303 = scmp.ne.s32.totalorder %s294, %s295
      %p304 = scmp.eq.s32.totalorder %s43, 0
      %p305 = por %p303, %p304
      %p306 = scmp.ne.s32.totalorder %s294, %s295
      %p307 = scmp.eq.s32.totalorder %s44, 1
      %p308 = por %p306, %p307
      %p310 = scmp.ne.s32.totalorder %s295, %s309
      %p311 = scmp.eq.s32.totalorder %s44, 0
      %p312 = por %p310, %p311
      %s314 = sadd.s32 %s313, 1
      %p317 = scmp.eq.s32.totalorder %s38, 1
      %p318 = scmp.ne.s32.totalorder %s313, %s315
      %p319 = scmp.eq.s32.totalorder %s38, 0
      %p320 = por %p318, %p319
      %p321 = scmp.ne.s32.totalorder %s313, %s315
      %p322 = scmp.eq.s32.totalorder %s43, 1
      %p323 = por %p321, %p322
      %p324 = scmp.ne.s32.totalorder %s315, %s316
      %p325 = scmp.eq.s32.totalorder %s43, 0
      %p326 = por %p324, %p325
      %p327 = scmp.ne.s32.totalorder %s315, %s316
      %p328 = scmp.eq.s32.totalorder %s44, 1
      %p329 = por %p327, %p328
      %p331 = scmp.ne.s32.totalorder %s316, %s330
      %p332 = scmp.eq.s32.totalorder %s44, 0
      %p333 = por %p331, %p332
      %s335 = sadd.s32 %s334, 1
      %p338 = scmp.eq.s32.totalorder %s38, 1
      %p339 = scmp.ne.s32.totalorder %s334, %s336
      %p340 = scmp.eq.s32.totalorder %s38, 0
      %p341 = por %p339, %p340
      %p342 = scmp.ne.s32.totalorder %s334, %s336
      %p343 = scmp.eq.s32.totalorder %s43, 1
      %p344 = por %p342, %p343
      %p345 = scmp.ne.s32.totalorder %s336, %s337
      %p346 = scmp.eq.s32.totalorder %s43, 0
      %p347 = por %p345, %p346
      %p348 = scmp.ne.s32.totalorder %s336, %s337
      %p349 = scmp.eq.s32.totalorder %s44, 1
      %p350 = por %p348, %p349
      %p352 = scmp.ne.s32.totalorder %s337, %s351
      %p353 = scmp.eq.s32.totalorder %s44, 0
      %p354 = por %p352, %p353
      %s356 = sadd.s32 %s355, 1
      %p359 = scmp.eq.s32.totalorder %s38, 1
      %p360 = scmp.ne.s32.totalorder %s355, %s357
      %p361 = scmp.eq.s32.totalorder %s38, 0
      %p362 = por %p360, %p361
      %p363 = scmp.ne.s32.totalorder %s355, %s357
      %p364 = scmp.eq.s32.totalorder %s43, 1
      %p365 = por %p363, %p364
      %p366 = scmp.ne.s32.totalorder %s357, %s358
      %p367 = scmp.eq.s32.totalorder %s43, 0
      %p368 = por %p366, %p367
      %p369 = scmp.ne.s32.totalorder %s357, %s358
      %p370 = scmp.eq.s32.totalorder %s44, 1
      %p371 = por %p369, %p370
      %p373 = scmp.ne.s32.totalorder %s358, %s372
      %p374 = scmp.eq.s32.totalorder %s44, 0
      %p375 = por %p373, %p374
      %s377 = sadd.s32 %s376, 1
      %p380 = scmp.eq.s32.totalorder %s38, 1
      %p381 = scmp.ne.s32.totalorder %s376, %s378
      %p382 = scmp.eq.s32.totalorder %s38, 0
      %p383 = por %p381, %p382
      %p384 = scmp.ne.s32.totalorder %s376, %s378
      %p385 = scmp.eq.s32.totalorder %s43, 1
      %p386 = por %p384, %p385
      %p387 = scmp.ne.s32.totalorder %s378, %s379
      %p388 = scmp.eq.s32.totalorder %s43, 0
      %p389 = por %p387, %p388
      %p390 = scmp.ne.s32.totalorder %s378, %s379
      %p391 = scmp.eq.s32.totalorder %s44, 1
      %p392 = por %p390, %p391
      %p394 = scmp.ne.s32.totalorder %s379, %s393
      %p395 = scmp.eq.s32.totalorder %s44, 0
      %p396 = por %p394, %p395
      %s398 = sadd.s32 %s397, 1
      %p401 = scmp.eq.s32.totalorder %s38, 1
      %p402 = scmp.ne.s32.totalorder %s397, %s399
      %p403 = scmp.eq.s32.totalorder %s38, 0
      %p404 = por %p402, %p403
      %p405 = scmp.ne.s32.totalorder %s397, %s399
      %p406 = scmp.eq.s32.totalorder %s43, 1
      %p407 = por %p405, %p406
      %p408 = scmp.ne.s32.totalorder %s399, %s400
      %p409 = scmp.eq.s32.totalorder %s43, 0
      %p410 = por %p408, %p409
      %p411 = scmp.ne.s32.totalorder %s399, %s400
      %p412 = scmp.eq.s32.totalorder %s44, 1
      %p413 = por %p411, %p412
      %p415 = scmp.ne.s32.totalorder %s400, %s414
      %p416 = scmp.eq.s32.totalorder %s44, 0
      %p417 = por %p415, %p416
      %s419 = sadd.s32 %s418, 1
      %p422 = scmp.eq.s32.totalorder %s38, 1
      %p423 = scmp.ne.s32.totalorder %s418, %s420
      %p424 = scmp.eq.s32.totalorder %s38, 0
      %p425 = por %p423, %p424
      %p426 = scmp.ne.s32.totalorder %s418, %s420
      %p427 = scmp.eq.s32.totalorder %s43, 1
      %p428 = por %p426, %p427
      %p429 = scmp.ne.s32.totalorder %s420, %s421
      %p430 = scmp.eq.s32.totalorder %s43, 0
      %p431 = por %p429, %p430
      %p432 = scmp.ne.s32.totalorder %s420, %s421
      %p433 = scmp.eq.s32.totalorder %s44, 1
      %p434 = por %p432, %p433
      %p436 = scmp.ne.s32.totalorder %s421, %s435
      %p437 = scmp.eq.s32.totalorder %s44, 0
      %p438 = por %p436, %p437
      %s440 = sadd.s32 %s439, 1
      %p443 = scmp.eq.s32.totalorder %s38, 1
      %p444 = scmp.ne.s32.totalorder %s439, %s441
      %p445 = scmp.eq.s32.totalorder %s38, 0
      %p446 = por %p444, %p445
      %p447 = scmp.ne.s32.totalorder %s439, %s441
      %p448 = scmp.eq.s32.totalorder %s43, 1
      %p449 = por %p447, %p448
      %p450 = scmp.ne.s32.totalorder %s441, %s442
      %p451 = scmp.eq.s32.totalorder %s43, 0
      %p452 = por %p450, %p451
      %p453 = scmp.ne.s32.totalorder %s441, %s442
      %p454 = scmp.eq.s32.totalorder %s44, 1
      %p455 = por %p453, %p454
      %p457 = scmp.ne.s32.totalorder %s442, %s456
      %p458 = scmp.eq.s32.totalorder %s44, 0
      %p459 = por %p457, %p458
      %s460 = ssub.s32 %s38, %s45
      %p461 = scmp.eq.s32.totalorder %s460, 0
      %s463 = sadd.s32 %s462, 1
      %s464 = scalar_select %p461, %s462, %s463
      %p467 = pneg %p461
      %p468 = scmp.eq.s32.totalorder %s38, 1
      %p469 = por %p467, %p468
      %p470 = scmp.ne.s32.totalorder %s462, %s465
      %p471 = scmp.eq.s32.totalorder %s38, 0
      %p472 = por %p470, %p471
      %p473 = scmp.ne.s32.totalorder %s462, %s465
      %p474 = scmp.eq.s32.totalorder %s43, 1
      %p475 = por %p473, %p474
      %p476 = scmp.ne.s32.totalorder %s465, %s466
      %p477 = scmp.eq.s32.totalorder %s43, 0
      %p478 = por %p476, %p477
      %p479 = scmp.ne.s32.totalorder %s465, %s466
      %p480 = scmp.eq.s32.totalorder %s44, 1
      %p481 = por %p479, %p480
      %p483 = scmp.ne.s32.totalorder %s466, %s482
      %p484 = scmp.eq.s32.totalorder %s44, 0
      %p485 = por %p483, %p484
      %p486 = scmp.le.s32.totalorder 1, %s38
      %p487 = scmp.lt.s32.totalorder %s38, 3
      %p488 = pnand %p486, %p487
      %p489 = pneg %p488
      // Predicated region
      $region9: #{tpu_custom_call.1} parent=5 // pred_check
        _
      $region10: #{tpu_custom_call.1} parent=5 // pred_check_branch
        %491 = sbr.rel (%p488) target = $region12
      $region11: #{tpu_custom_call.1} parent=5 // pred_region
        %s492 = ssub.s32 %s38, 1
        // Predicated region
        $region13: #{tpu_custom_call.1} parent=11 // pred_check
          %p493 = pneg %p137
        $region14: #{tpu_custom_call.1} parent=11 // pred_check_branch
          %495 = sbr.rel (%p493) target = $region16
        $region15: #{tpu_custom_call.1} parent=11 // pred_region
          _
        $region16: #{tpu_custom_call.1} parent=11 // pred_fallthru
          _
        // Predicated region
        $region17: #{tpu_custom_call.1} parent=11 // pred_check
          %p496 = pneg %p158
        $region18: #{tpu_custom_call.1} parent=11 // pred_check_branch
          %498 = sbr.rel (%p496) target = $region20
        $region19: #{tpu_custom_call.1} parent=11 // pred_region
          %s500 = ssub.s32 3072, 3072
          %501 = vsyncadd [#allocation6], %s500
          %s502 = sshll.u32 [#allocation7], 4
          %s503 = int_to_ptr.vmem [resolvable:$true] %s502
          %508 = dma.hbm_to_vmem [thread:$0]  %s4, 3072, %s503, [#allocation6], 192, 192, 12
        $region20: #{tpu_custom_call.1} parent=11 // pred_fallthru
          _
        // Predicated region
        $region21: #{tpu_custom_call.1} parent=11 // pred_check
          %p509 = pneg %p179
        $region22: #{tpu_custom_call.1} parent=11 // pred_check_branch
          %511 = sbr.rel (%p509) target = $region24
        $region23: #{tpu_custom_call.1} parent=11 // pred_region
          _
        $region24: #{tpu_custom_call.1} parent=11 // pred_fallthru
          _
        // Predicated region
        $region25: #{tpu_custom_call.1} parent=11 // pred_check
          %p512 = pneg %p200
        $region26: #{tpu_custom_call.1} parent=11 // pred_check_branch
          %514 = sbr.rel (%p512) target = $region28
        $region27: #{tpu_custom_call.1} parent=11 // pred_region
          %s516 = ssub.s32 16, 16
          %517 = vsyncadd [#allocation9], %s516
          %s519 = sshll.u32 [#allocation8], 4
          %s520 = int_to_ptr.vmem [resolvable:$true] %s519
          %522 = dma.hbm_to_vmem [thread:$0]  %s6, 16, %s520, [#allocation9]
        $region28: #{tpu_custom_call.1} parent=11 // pred_fallthru
          _
        // Predicated region
        $region29: #{tpu_custom_call.1} parent=11 // pred_check
          %p523 = pneg %p221
        $region30: #{tpu_custom_call.1} parent=11 // pred_check_branch
          %525 = sbr.rel (%p523) target = $region32
        $region31: #{tpu_custom_call.1} parent=11 // pred_region
          %s527 = ssub.s32 1024, 1024
          %528 = vsyncadd [#allocation9], %s527
          %s529 = sshll.u32 [#allocation10], 4
          %s530 = int_to_ptr.vmem [resolvable:$true] %s529
          %535 = dma.hbm_to_vmem [thread:$0]  %s7, 1024, %s530, [#allocation9], 64, 64, 4
        $region32: #{tpu_custom_call.1} parent=11 // pred_fallthru
          _
        // Predicated region
        $region33: #{tpu_custom_call.1} parent=11 // pred_check
          %p536 = pneg %p242
        $region34: #{tpu_custom_call.1} parent=11 // pred_check_branch
          %538 = sbr.rel (%p536) target = $region36
        $region35: #{tpu_custom_call.1} parent=11 // pred_region
          %s540 = ssub.s32 2048, 2048
          %541 = vsyncadd [#allocation12], %s540
          %s542 = sshll.u32 [#allocation11], 4
          %s543 = int_to_ptr.vmem [resolvable:$true] %s542
          %548 = dma.hbm_to_vmem [thread:$0]  %s8, 2048, %s543, [#allocation12], 128, 128, 8
        $region36: #{tpu_custom_call.1} parent=11 // pred_fallthru
          _
        // Predicated region
        $region37: #{tpu_custom_call.1} parent=11 // pred_check
          %p549 = pneg %p263
        $region38: #{tpu_custom_call.1} parent=11 // pred_check_branch
          %551 = sbr.rel (%p549) target = $region40
        $region39: #{tpu_custom_call.1} parent=11 // pred_region
          %s553 = ssub.s32 1024, 1024
          %554 = vsyncadd [#allocation12], %s553
          %s555 = sshll.u32 [#allocation13], 4
          %s556 = int_to_ptr.vmem [resolvable:$true] %s555
          %561 = dma.hbm_to_vmem [thread:$0]  %s9, 1024, %s556, [#allocation12], 64, 64, 4
        $region40: #{tpu_custom_call.1} parent=11 // pred_fallthru
          _
        // Predicated region
        $region41: #{tpu_custom_call.1} parent=11 // pred_check
          %p562 = pneg %p284
        $region42: #{tpu_custom_call.1} parent=11 // pred_check_branch
          %564 = sbr.rel (%p562) target = $region44
        $region43: #{tpu_custom_call.1} parent=11 // pred_region
          %s566 = ssub.s32 16, 16
          %567 = vsyncadd [#allocation15], %s566
          %s569 = sshll.u32 [#allocation14], 4
          %s570 = int_to_ptr.vmem [resolvable:$true] %s569
          %572 = dma.hbm_to_vmem [thread:$0]  %s10, 16, %s570, [#allocation15]
        $region44: #{tpu_custom_call.1} parent=11 // pred_fallthru
          _
        // Predicated region
        $region45: #{tpu_custom_call.1} parent=11 // pred_check
          %p573 = pneg %p305
        $region46: #{tpu_custom_call.1} parent=11 // pred_check_branch
          %575 = sbr.rel (%p573) target = $region48
        $region47: #{tpu_custom_call.1} parent=11 // pred_region
          %s577 = ssub.s32 16, 16
          %578 = vsyncadd [#allocation15], %s577
          %s580 = sshll.u32 [#allocation16], 4
          %s581 = int_to_ptr.vmem [resolvable:$true] %s580
          %583 = dma.hbm_to_vmem [thread:$0]  %s11, 16, %s581, [#allocation15]
        $region48: #{tpu_custom_call.1} parent=11 // pred_fallthru
          _
        // Predicated region
        $region49: #{tpu_custom_call.1} parent=11 // pred_check
          %p584 = pneg %p326
        $region50: #{tpu_custom_call.1} parent=11 // pred_check_branch
          %586 = sbr.rel (%p584) target = $region52
        $region51: #{tpu_custom_call.1} parent=11 // pred_region
          %s588 = ssub.s32 16, 16
          %589 = vsyncadd [#allocation18], %s588
          %s591 = sshll.u32 [#allocation17], 4
          %s592 = int_to_ptr.vmem [resolvable:$true] %s591
          %594 = dma.hbm_to_vmem [thread:$0]  %s12, 16, %s592, [#allocation18]
        $region52: #{tpu_custom_call.1} parent=11 // pred_fallthru
          _
        // Predicated region
        $region53: #{tpu_custom_call.1} parent=11 // pred_check
          %p595 = pneg %p347
        $region54: #{tpu_custom_call.1} parent=11 // pred_check_branch
          %597 = sbr.rel (%p595) target = $region56
        $region55: #{tpu_custom_call.1} parent=11 // pred_region
          _
        $region56: #{tpu_custom_call.1} parent=11 // pred_fallthru
          _
        // Predicated region
        $region57: #{tpu_custom_call.1} parent=11 // pred_check
          %p598 = pneg %p368
        $region58: #{tpu_custom_call.1} parent=11 // pred_check_branch
          %600 = sbr.rel (%p598) target = $region60
        $region59: #{tpu_custom_call.1} parent=11 // pred_region
          _
        $region60: #{tpu_custom_call.1} parent=11 // pred_fallthru
          _
        // Predicated region
        $region61: #{tpu_custom_call.1} parent=11 // pred_check
          %p601 = pneg %p389
        $region62: #{tpu_custom_call.1} parent=11 // pred_check_branch
          %603 = sbr.rel (%p601) target = $region64
        $region63: #{tpu_custom_call.1} parent=11 // pred_region
          %s605 = ssub.s32 1024, 1024
          %606 = vsyncadd [#allocation18], %s605
          %s607 = sshll.u32 [#allocation19], 4
          %s608 = int_to_ptr.vmem [resolvable:$true] %s607
          %613 = dma.hbm_to_vmem [thread:$0]  %s15, 1024, %s608, [#allocation18], 64, 64, 4
        $region64: #{tpu_custom_call.1} parent=11 // pred_fallthru
          _
        // Predicated region
        $region65: #{tpu_custom_call.1} parent=11 // pred_check
          %p614 = pneg %p410
        $region66: #{tpu_custom_call.1} parent=11 // pred_check_branch
          %616 = sbr.rel (%p614) target = $region68
        $region67: #{tpu_custom_call.1} parent=11 // pred_region
          _
        $region68: #{tpu_custom_call.1} parent=11 // pred_fallthru
          _
        // Predicated region
        $region69: #{tpu_custom_call.1} parent=11 // pred_check
          %p617 = pneg %p431
        $region70: #{tpu_custom_call.1} parent=11 // pred_check_branch
          %619 = sbr.rel (%p617) target = $region72
        $region71: #{tpu_custom_call.1} parent=11 // pred_region
          _
        $region72: #{tpu_custom_call.1} parent=11 // pred_fallthru
          _
        // Predicated region
        $region73: #{tpu_custom_call.1} parent=11 // pred_check
          %p620 = pneg %p452
        $region74: #{tpu_custom_call.1} parent=11 // pred_check_branch
          %622 = sbr.rel (%p620) target = $region76
        $region75: #{tpu_custom_call.1} parent=11 // pred_region
          _
        $region76: #{tpu_custom_call.1} parent=11 // pred_fallthru
          _
      $region12: #{tpu_custom_call.1} parent=5 // pred_fallthru
        _
      %p623 = scmp.lt.s32.totalorder %s38, 2
      // Predicated region
      $region77: #{tpu_custom_call.1} parent=5 // pred_check
        %p624 = pneg %p623
      $region78: #{tpu_custom_call.1} parent=5 // pred_check_branch
        %626 = sbr.rel (%p624) target = $region80
      $region79: #{tpu_custom_call.1} parent=5 // pred_region
        // Predicated region
        $region81: #{tpu_custom_call.1} parent=79 // pred_check
          %p627 = pneg %p58
        $region82: #{tpu_custom_call.1} parent=79 // pred_check_branch
          %629 = sbr.rel (%p627) target = $region84
        $region83: #{tpu_custom_call.1} parent=79 // pred_region
          %s630 = sand.u32 %s48, 1
          %s631 = scalar_lea.sflag [#allocation3], %s630
          %s632 = sand.u32 %s48, 1
          %s633 = smul.addr %s632, 8
          %s634 = scalar_lea.vmem [#allocation2], %s633
          %s636 = ssub.s32 128, 128
          %637 = vsyncadd %s631, %s636
          %s638 = smul.addr %s38, 128
          %s639 = scalar_lea.hbm %s0, %s638
          %s641 = sshll.u32 %s634, 4
          %s642 = int_to_ptr.vmem [resolvable:$true] %s641
          %644 = dma.hbm_to_vmem [thread:$0]  %s639, 128, %s642, %s631
        $region84: #{tpu_custom_call.1} parent=79 // pred_fallthru
          _
        // Predicated region
        $region85: #{tpu_custom_call.1} parent=79 // pred_check
          %p645 = pneg %p84
        $region86: #{tpu_custom_call.1} parent=79 // pred_check_branch
          %647 = sbr.rel (%p645) target = $region88
        $region87: #{tpu_custom_call.1} parent=79 // pred_region
          %s648 = sand.u32 %s38, 1
          %s649 = scalar_lea.sflag [#allocation6], %s648
          %s650 = sand.u32 %s74, 1
          %s651 = smul.addr %s650, 8
          %s652 = scalar_lea.vmem [#allocation5], %s651
          %s654 = ssub.s32 128, 128
          %655 = vsyncadd %s649, %s654
          %s656 = smul.addr %s38, 128
          %s657 = scalar_lea.hbm %s1, %s656
          %s659 = sshll.u32 %s652, 4
          %s660 = int_to_ptr.vmem [resolvable:$true] %s659
          %662 = dma.hbm_to_vmem [thread:$0]  %s657, 128, %s660, %s649
        $region88: #{tpu_custom_call.1} parent=79 // pred_fallthru
          _
        // Predicated region
        $region89: #{tpu_custom_call.1} parent=79 // pred_check
          %p663 = pneg %p110
        $region90: #{tpu_custom_call.1} parent=79 // pred_check_branch
          %665 = sbr.rel (%p663) target = $region92
        $region91: #{tpu_custom_call.1} parent=79 // pred_region
          %p666 = scmp.lt.s32.totalorder %s38, 1
          %s667 = scalar_select %p666, %s38, 1
          %s668 = smul.addr %s667, 8
          %s669 = scalar_lea.vmem %s2, %s668
        $region92: #{tpu_custom_call.1} parent=79 // pred_fallthru
          _
      $region80: #{tpu_custom_call.1} parent=5 // pred_fallthru
        _
      %p670 = scmp.le.s32.totalorder 1, %s38
      %p671 = scmp.lt.s32.totalorder %s38, 3
      %p672 = pnand %p670, %p671
      %p673 = pneg %p672
      // Predicated region
      $region93: #{tpu_custom_call.1} parent=5 // pred_check
        _
      $region94: #{tpu_custom_call.1} parent=5 // pred_check_branch
        %675 = sbr.rel (%p672) target = $region96
      $region95: #{tpu_custom_call.1} parent=5 // pred_region
        %s676 = ssub.s32 %s38, 1
        %s677 = sand.u32 %s51, 1
        %s678 = scalar_lea.sflag [#allocation3], %s677
        %s679 = sand.u32 %s51, 1
        %s680 = smul.addr %s679, 8
        %s681 = scalar_lea.vmem [#allocation2], %s680
        // Predicated region
        $region97: #{tpu_custom_call.1} parent=95 // pred_check
          %p682 = pneg %p64
        $region98: #{tpu_custom_call.1} parent=95 // pred_check_branch
          %684 = sbr.rel (%p682) target = $region100
        $region99: #{tpu_custom_call.1} parent=95 // pred_region
          %685 = dma.done %s678, 128
        $region100: #{tpu_custom_call.1} parent=95 // pred_fallthru
          _
        %s686 = sand.u32 %s43, 1
        %s687 = scalar_lea.sflag [#allocation6], %s686
        %s688 = sand.u32 %s77, 1
        %s689 = smul.addr %s688, 8
        %s690 = scalar_lea.vmem [#allocation5], %s689
        // Predicated region
        $region101: #{tpu_custom_call.1} parent=95 // pred_check
          %p691 = pneg %p90
        $region102: #{tpu_custom_call.1} parent=95 // pred_check_branch
          %693 = sbr.rel (%p691) target = $region104
        $region103: #{tpu_custom_call.1} parent=95 // pred_region
          %694 = dma.done %s687, 128
        $region104: #{tpu_custom_call.1} parent=95 // pred_fallthru
          _
        // Predicated region
        $region105: #{tpu_custom_call.1} parent=95 // pred_check
          %p695 = pneg %p158
        $region106: #{tpu_custom_call.1} parent=95 // pred_check_branch
          %697 = sbr.rel (%p695) target = $region108
        $region107: #{tpu_custom_call.1} parent=95 // pred_region
          %698 = dma.done [#allocation6], 3072
        $region108: #{tpu_custom_call.1} parent=95 // pred_fallthru
          _
        // Predicated region
        $region109: #{tpu_custom_call.1} parent=95 // pred_check
          %p699 = pneg %p200
        $region110: #{tpu_custom_call.1} parent=95 // pred_check_branch
          %701 = sbr.rel (%p699) target = $region112
        $region111: #{tpu_custom_call.1} parent=95 // pred_region
          %702 = dma.done [#allocation9], 16
        $region112: #{tpu_custom_call.1} parent=95 // pred_fallthru
          _
        // Predicated region
        $region113: #{tpu_custom_call.1} parent=95 // pred_check
          %p703 = pneg %p221
        $region114: #{tpu_custom_call.1} parent=95 // pred_check_branch
          %705 = sbr.rel (%p703) target = $region116
        $region115: #{tpu_custom_call.1} parent=95 // pred_region
          %706 = dma.done [#allocation9], 1024
        $region116: #{tpu_custom_call.1} parent=95 // pred_fallthru
          _
        // Predicated region
        $region117: #{tpu_custom_call.1} parent=95 // pred_check
          %p707 = pneg %p242
        $region118: #{tpu_custom_call.1} parent=95 // pred_check_branch
          %709 = sbr.rel (%p707) target = $region120
        $region119: #{tpu_custom_call.1} parent=95 // pred_region
          %710 = dma.done [#allocation12], 2048
        $region120: #{tpu_custom_call.1} parent=95 // pred_fallthru
          _
        // Predicated region
        $region121: #{tpu_custom_call.1} parent=95 // pred_check
          %p711 = pneg %p263
        $region122: #{tpu_custom_call.1} parent=95 // pred_check_branch
          %713 = sbr.rel (%p711) target = $region124
        $region123: #{tpu_custom_call.1} parent=95 // pred_region
          %714 = dma.done [#allocation12], 1024
        $region124: #{tpu_custom_call.1} parent=95 // pred_fallthru
          _
        // Predicated region
        $region125: #{tpu_custom_call.1} parent=95 // pred_check
          %p715 = pneg %p284
        $region126: #{tpu_custom_call.1} parent=95 // pred_check_branch
          %717 = sbr.rel (%p715) target = $region128
        $region127: #{tpu_custom_call.1} parent=95 // pred_region
          %718 = dma.done [#allocation15], 16
        $region128: #{tpu_custom_call.1} parent=95 // pred_fallthru
          _
        // Predicated region
        $region129: #{tpu_custom_call.1} parent=95 // pred_check
          %p719 = pneg %p305
        $region130: #{tpu_custom_call.1} parent=95 // pred_check_branch
          %721 = sbr.rel (%p719) target = $region132
        $region131: #{tpu_custom_call.1} parent=95 // pred_region
          %722 = dma.done [#allocation15], 16
        $region132: #{tpu_custom_call.1} parent=95 // pred_fallthru
          _
        // Predicated region
        $region133: #{tpu_custom_call.1} parent=95 // pred_check
          %p723 = pneg %p326
        $region134: #{tpu_custom_call.1} parent=95 // pred_check_branch
          %725 = sbr.rel (%p723) target = $region136
        $region135: #{tpu_custom_call.1} parent=95 // pred_region
          %726 = dma.done [#allocation18], 16
        $region136: #{tpu_custom_call.1} parent=95 // pred_fallthru
          _
        // Predicated region
        $region137: #{tpu_custom_call.1} parent=95 // pred_check
          %p727 = pneg %p389
        $region138: #{tpu_custom_call.1} parent=95 // pred_check_branch
          %729 = sbr.rel (%p727) target = $region140
        $region139: #{tpu_custom_call.1} parent=95 // pred_region
          %730 = dma.done [#allocation18], 1024
        $region140: #{tpu_custom_call.1} parent=95 // pred_fallthru
          _
        %s731 = sand.u32 %s51, 1
        %s732 = scalar_lea.sflag [#allocation3], %s731
        %s733 = sand.u32 %s51, 1
        %s734 = smul.addr %s733, 8
        %s735 = scalar_lea.vmem [#allocation2], %s734
        %p736 = pneg %p64
        %p737 = pneg %p61
        %s738 = sand.u32 %s43, 1
        %s739 = scalar_lea.sflag [#allocation6], %s738
        %s740 = sand.u32 %s77, 1
        %s741 = smul.addr %s740, 8
        %s742 = scalar_lea.vmem [#allocation5], %s741
        %p743 = pneg %p90
        %p744 = pneg %p87
        %p745 = scmp.lt.s32.totalorder %s43, 1
        %s746 = scalar_select %p745, %s43, 1
        %s747 = smul.addr %s746, 8
        %s748 = scalar_lea.vmem %s2, %s747
        %p749 = pneg %p116
        %p750 = pneg %p113
        %p751 = pneg %p137
        %p752 = pneg %p134
        %p753 = pneg %p158
        %p754 = pneg %p155
        %p755 = pneg %p179
        %p756 = pneg %p176
        %p757 = pneg %p200
        %p758 = pneg %p197
        %p759 = pneg %p221
        %p760 = pneg %p218
        %p761 = pneg %p242
        %p762 = pneg %p239
        %p763 = pneg %p263
        %p764 = pneg %p260
        %p765 = pneg %p284
        %p766 = pneg %p281
        %p767 = pneg %p305
        %p768 = pneg %p302
        %p769 = pneg %p326
        %p770 = pneg %p323
        %p771 = pneg %p347
        %p772 = pneg %p344
        %p773 = pneg %p368
        %p774 = pneg %p365
        %p775 = pneg %p389
        %p776 = pneg %p386
        %p777 = pneg %p410
        %p778 = pneg %p407
        %p779 = pneg %p431
        %p780 = pneg %p428
        %p781 = pneg %p452
        %p782 = pneg %p449
        %p783 = pneg %p478
        %p784 = pneg %p475
        %s785 = sand.u32 %s465, 1
        %s786 = scalar_lea.sflag [#allocation4], %s785
        %s787 = sand.u32 %s465, 1
        %s788 = smul.addr %s787, 8
        %s789 = scalar_lea.vmem [#allocation20], %s788
        %p790 = scmp.lt.s32.totalorder %s43, 1
        %s791 = scalar_select %p790, %s43, 1
        %s792 = smul.addr %s791, 8
        %s793 = scalar_lea.vmem %s2, %s792
        %v795 = vlaneseq
        %v796 = vand.u32 %v795, 127
        %vm797 = vcmp.lt.s32.totalorder %v796, 32
        %v798 = vld [vmem:[%s681] sm:$0xff]
        %v799 = vld [vmem:[%s690] sm:$0xff]
        %v800 = vld [vmem:[%s3] sm:$0xff]
        %v801 = vadd.f32 %v798, %v800
        %v802 = vld [vmem:[#allocation7] sm:$0xff]
        %v803 = vld [vmem:[#allocation7 + $0x8] sm:$0xf]
        %v804 = vld [vmem:[#allocation7 + $0xc] sm:$0xff]
        %v805 = vld [vmem:[#allocation7 + $0x14] sm:$0xf]
        %v806 = vld [vmem:[#allocation7 + $0x18] sm:$0xff]
        %v807 = vld [vmem:[#allocation7 + $0x20] sm:$0xf]
        %v808 = vld [vmem:[#allocation7 + $0x24] sm:$0xff]
        %v809 = vld [vmem:[#allocation7 + $0x2c] sm:$0xf]
        %v810 = vld [vmem:[#allocation7 + $0x30] sm:$0xff]
        %v811 = vld [vmem:[#allocation7 + $0x38] sm:$0xf]
        %v812 = vld [vmem:[#allocation7 + $0x3c] sm:$0xff]
        %v813 = vld [vmem:[#allocation7 + $0x44] sm:$0xf]
        %v814 = vld [vmem:[#allocation7 + $0x48] sm:$0xff]
        %v815 = vld [vmem:[#allocation7 + $0x50] sm:$0xf]
        %v816 = vld [vmem:[#allocation7 + $0x54] sm:$0xff]
        %v817 = vld [vmem:[#allocation7 + $0x5c] sm:$0xf]
        %v818 = vld [vmem:[#allocation7 + $0x60] sm:$0xff]
        %v819 = vld [vmem:[#allocation7 + $0x68] sm:$0xf]
        %v820 = vld [vmem:[#allocation7 + $0x6c] sm:$0xff]
        %v821 = vld [vmem:[#allocation7 + $0x74] sm:$0xf]
        %v822 = vld [vmem:[#allocation7 + $0x78] sm:$0xff]
        %v823 = vld [vmem:[#allocation7 + $0x80] sm:$0xf]
        %v824 = vld [vmem:[#allocation7 + $0x84] sm:$0xff]
        %v825 = vld [vmem:[#allocation7 + $0x8c] sm:$0xf]
        %v826 = vld [vmem:[#allocation7 + $0x90] sm:$0xff]
        %v827 = vld [vmem:[#allocation7 + $0x98] sm:$0xf]
        %v828 = vld [vmem:[#allocation7 + $0x9c] sm:$0xff]
        %v829 = vld [vmem:[#allocation7 + $0xa4] sm:$0xf]
        %v830 = vld [vmem:[#allocation7 + $0xa8] sm:$0xff]
        %v831 = vld [vmem:[#allocation7 + $0xb0] sm:$0xf]
        %v832 = vld [vmem:[#allocation7 + $0xb4] sm:$0xff]
        %v833 = vld [vmem:[#allocation7 + $0xbc] sm:$0xf]
        %v834 = vpack.c.bf16 %v801, %v801
        %v867 = vunpack.c.l.b16 %v802
        %v868 = vunpack.c.h.b16 %v802
        %v869 = vunpack.c.l.b16 %v803
        %v870 = vunpack.c.l.b16 %v804
        %v871 = vunpack.c.h.b16 %v804
        %v872 = vunpack.c.l.b16 %v805
        %v873 = vunpack.c.l.b16 %v806
        %v874 = vunpack.c.h.b16 %v806
        %v875 = vunpack.c.l.b16 %v807
        %v876 = vunpack.c.l.b16 %v808
        %v877 = vunpack.c.h.b16 %v808
        %v878 = vunpack.c.l.b16 %v809
        %v879 = vunpack.c.l.b16 %v810
        %v880 = vunpack.c.h.b16 %v810
        %v881 = vunpack.c.l.b16 %v811
        %v882 = vunpack.c.l.b16 %v812
        %v883 = vunpack.c.h.b16 %v812
        %v884 = vunpack.c.l.b16 %v813
        %v885 = vunpack.c.l.b16 %v814
        %v886 = vunpack.c.h.b16 %v814
        %v887 = vunpack.c.l.b16 %v815
        %v888 = vunpack.c.l.b16 %v816
        %v889 = vunpack.c.h.b16 %v816
        %v890 = vunpack.c.l.b16 %v817
        %v891 = vunpack.c.l.b16 %v818
        %v892 = vunpack.c.h.b16 %v818
        %v893 = vunpack.c.l.b16 %v819
        %v894 = vunpack.c.l.b16 %v820
        %v895 = vunpack.c.h.b16 %v820
        %v896 = vunpack.c.l.b16 %v821
        %v897 = vunpack.c.l.b16 %v822
        %v898 = vunpack.c.h.b16 %v822
        %v899 = vunpack.c.l.b16 %v823
        %v900 = vunpack.c.l.b16 %v824
        %v901 = vunpack.c.h.b16 %v824
        %v902 = vunpack.c.l.b16 %v825
        %v903 = vunpack.c.l.b16 %v826
        %v904 = vunpack.c.h.b16 %v826
        %v905 = vunpack.c.l.b16 %v827
        %v906 = vunpack.c.l.b16 %v828
        %v907 = vunpack.c.h.b16 %v828
        %v908 = vunpack.c.l.b16 %v829
        %v909 = vunpack.c.l.b16 %v830
        %v910 = vunpack.c.h.b16 %v830
        %v911 = vunpack.c.l.b16 %v831
        %v912 = vunpack.c.l.b16 %v832
        %v913 = vunpack.c.h.b16 %v832
        %v914 = vunpack.c.l.b16 %v833
        %v915 = vpack.c.b16 %v870, %v867
        %v916 = vpack.c.b16 %v871, %v868
        %v917 = vpack.c.b16 %v872, %v869
        %v918 = vpack.c.b16 %v876, %v873
        %v919 = vpack.c.b16 %v877, %v874
        %v920 = vpack.c.b16 %v878, %v875
        %v921 = vpack.c.b16 %v882, %v879
        %v922 = vpack.c.b16 %v883, %v880
        %v923 = vpack.c.b16 %v884, %v881
        %v924 = vpack.c.b16 %v888, %v885
        %v925 = vpack.c.b16 %v889, %v886
        %v926 = vpack.c.b16 %v890, %v887
        %v927 = vpack.c.b16 %v894, %v891
        %v928 = vpack.c.b16 %v895, %v892
        %v929 = vpack.c.b16 %v896, %v893
        %v930 = vpack.c.b16 %v900, %v897
        %v931 = vpack.c.b16 %v901, %v898
        %v932 = vpack.c.b16 %v902, %v899
        %v933 = vpack.c.b16 %v906, %v903
        %v934 = vpack.c.b16 %v907, %v904
        %v935 = vpack.c.b16 %v908, %v905
        %v936 = vpack.c.b16 %v912, %v909
        %v937 = vpack.c.b16 %v913, %v910
        %v938 = vpack.c.b16 %v914, %v911
        %963 = vmatprep.subr.bf16.mxu0 %v916
        %964 = vmatpush1.bf16.msra.mxu0 %v915
        %965 = vmatprep.subr.bf16.mxu0 %v919
        %966 = vmatpush1.bf16.msra.mxu0 %v918
        %967 = vmatprep.subr.bf16.mxu0 %v922
        %968 = vmatpush1.bf16.msra.mxu0 %v921
        %969 = vmatprep.subr.bf16.mxu0 %v925
        %970 = vmatpush1.bf16.msra.mxu0 %v924
        %971 = vmatprep.subr.bf16.mxu0 %v928
        %972 = vmatpush1.bf16.msra.mxu0 %v927
        %973 = vmatprep.subr.bf16.mxu0 %v931
        %974 = vmatpush1.bf16.msra.mxu0 %v930
        %975 = vmatprep.subr.bf16.mxu0 %v934
        %976 = vmatpush1.bf16.msra.mxu0 %v933
        %977 = vmatprep.subr.bf16.mxu0 %v937
        %978 = vmatpush1.bf16.msra.mxu0 %v936
        %979 = vmatprep.subr.bf16.mxu0 0
        %980 = vmatpush1.bf16.msra.mxu0 0
        %981 = vmatprep.subr.bf16.mxu0 0
        %982 = vmatpush1.bf16.msra.mxu0 0
        %983 = vmatprep.subr.bf16.mxu0 0
        %984 = vmatpush1.bf16.msra.mxu0 0
        %985 = vmatprep.subr.bf16.mxu0 0
        %986 = vmatpush1.bf16.msra.mxu0 0
        %987 = vmatprep.subr.bf16.mxu0 0
        %988 = vmatpush1.bf16.msra.mxu0 0
        %989 = vmatprep.subr.bf16.mxu0 0
        %990 = vmatpush1.bf16.msra.mxu0 0
        %991 = vmatprep.subr.bf16.mxu0 0
        %992 = vmatpush1.bf16.msra.mxu0 0
        %993 = vmatprep.subr.bf16.mxu0 0
        %994 = vmatpush1.bf16.msra.mxu0 0
        %995 = vmatprep.mubr.bf16.mxu0 0
        %996 = vmatmul.mubr.bf16.gmra.mrb[0].mxu0 %v834
        %v997 = vpop.f32.mrb[0].mxu0
        %v998 = vadd.f32 0.0, %v997
        %v999 = vpop.f32.mrb[0].mxu0
        %v1000 = vadd.f32 0.0, %v999
        %v1001 = vpop.f32.mrb[0].mxu0
        %v1002 = vpop.f32.mrb[0].mxu0
        %1003 = vdwg.mxu0
        %1004 = vmatprep.subr.bf16.mxu0 0
        %1005 = vmatpush1.bf16.msra.mxu0 %v917
        %1006 = vmatprep.subr.bf16.mxu0 0
        %1007 = vmatpush1.bf16.msra.mxu0 %v920
        %1008 = vmatprep.subr.bf16.mxu0 0
        %1009 = vmatpush1.bf16.msra.mxu0 %v923
        %1010 = vmatprep.subr.bf16.mxu0 0
        %1011 = vmatpush1.bf16.msra.mxu0 %v926
        %1012 = vmatprep.subr.bf16.mxu0 0
        %1013 = vmatpush1.bf16.msra.mxu0 %v929
        %1014 = vmatprep.subr.bf16.mxu0 0
        %1015 = vmatpush1.bf16.msra.mxu0 %v932
        %1016 = vmatprep.subr.bf16.mxu0 0
        %1017 = vmatpush1.bf16.msra.mxu0 %v935
        %1018 = vmatprep.subr.bf16.mxu0 0
        %1019 = vmatpush1.bf16.msra.mxu0 %v938
        %1020 = vmatprep.subr.bf16.mxu0 0
        %1021 = vmatpush1.bf16.msra.mxu0 0
        %1022 = vmatprep.subr.bf16.mxu0 0
        %1023 = vmatpush1.bf16.msra.mxu0 0
        %1024 = vmatprep.subr.bf16.mxu0 0
        %1025 = vmatpush1.bf16.msra.mxu0 0
        %1026 = vmatprep.subr.bf16.mxu0 0
        %1027 = vmatpush1.bf16.msra.mxu0 0
        %1028 = vmatprep.subr.bf16.mxu0 0
        %1029 = vmatpush1.bf16.msra.mxu0 0
        %1030 = vmatprep.subr.bf16.mxu0 0
        %1031 = vmatpush1.bf16.msra.mxu0 0
        %1032 = vmatprep.subr.bf16.mxu0 0
        %1033 = vmatpush1.bf16.msra.mxu0 0
        %1034 = vmatprep.subr.bf16.mxu0 0
        %1035 = vmatpush1.bf16.msra.mxu0 0
        %1036 = vmatprep.mubr.bf16.mxu0 0
        %1037 = vmatmul.mubr.bf16.gmra.mrb[0].mxu0 %v834
        %v1038 = vpop.f32.mrb[0].mxu0
        %v1039 = vadd.f32 0.0, %v1038
        %v1040 = vpop.f32.mrb[0].mxu0
        %v1041 = vpop.f32.mrb[0].mxu0
        %v1042 = vpop.f32.mrb[0].mxu0
        %1043 = vdwg.mxu0
        %v1044 = vpack.c.bf16 %v998, %v998
        %v1045 = vpack.c.bf16 %v1000, %v1000
        %1046 = vmatprep.subr.bf16.mxu0 0
        %1047 = vmatpush1.bf16.xpose.msra.mxu0 %v1045
        %1048 = vmatprep.subr.bf16.mxu0 0
        %1049 = vmatpush1.bf16.xpose.msra.mxu0 0
        %1050 = vmatprep.subr.bf16.mxu0 0
        %1051 = vmatpush1.bf16.xpose.msra.mxu0 0
        %1052 = vmatprep.subr.bf16.mxu0 0
        %1053 = vmatpush1.bf16.xpose.msra.mxu0 0
        %1054 = vmatprep.subr.bf16.mxu0 0
        %1055 = vmatpush1.bf16.xpose.msra.mxu0 0
        %1056 = vmatprep.subr.bf16.mxu0 0
        %1057 = vmatpush1.bf16.xpose.msra.mxu0 0
        %1058 = vmatprep.subr.bf16.mxu0 0
        %1059 = vmatpush1.bf16.xpose.msra.mxu0 0
        %1060 = vmatprep.subr.bf16.mxu0 0
        %1061 = vmatpush1.bf16.xpose.msra.mxu0 0
        %1062 = vmatprep.subr.bf16.mxu0 0
        %1063 = vmatpush1.bf16.xpose.msra.mxu0 0
        %1064 = vmatprep.subr.bf16.mxu0 0
        %1065 = vmatpush1.bf16.xpose.msra.mxu0 0
        %1066 = vmatprep.subr.bf16.mxu0 0
        %1067 = vmatpush1.bf16.xpose.msra.mxu0 0
        %1068 = vmatprep.subr.bf16.mxu0 0
        %1069 = vmatpush1.bf16.xpose.msra.mxu0 0
        %1070 = vmatprep.subr.bf16.mxu0 0
        %1071 = vmatpush1.bf16.xpose.msra.mxu0 0
        %1072 = vmatprep.subr.bf16.mxu0 0
        %1073 = vmatpush1.bf16.xpose.msra.mxu0 0
        %1074 = vmatprep.subr.bf16.mxu0 0
        %1075 = vmatpush1.bf16.xpose.msra.mxu0 0
        %1076 = vmatprep.subr.bf16.mxu0 0
        %1077 = vmatpush1.bf16.xpose.msra.mxu0 0
        %1078 = vmatprep.mubr.bf16.mxu0 0
        %1079 = vmatmul.mubr.bf16.gmra.mrb[0].mxu0 %v1044
        %v1080 = vpop.f32.mrb[0].mxu0
        %v1081 = vadd.f32 0.0, %v1080
        %v1082 = vpop.f32.mrb[0].mxu0
        %v1083 = vpop.f32.mrb[0].mxu0
        %v1084 = vpop.f32.mrb[0].mxu0
        %1085 = vdwg.mxu0
        %v1086 = vmul.f32 %v1081, 0.17677669
        %v1087 = vld [vmem:[%s793] sm:$0xff]
        %vm1088 = vcmp.gt.f32.partialorder %v1087, 0.0
        %v1089 = vsel %vm1088, %v1086, -1e+09
        %vm1090 = vcmask 64512
        %v1091 = vsel %vm1090, %v1089, -inf
        %1092 = vmax.xlane.f32.xlu0 %v1091
        %v1093 = vpop.xlane.xlu0 %1092
        %v1094 = vsub.f32 %v1089, %v1093
        %v1095 = vmul.f32 %v1094, 1.442695
        %v1096 = vpow.pop %v1095
        %v1097 = vsel %vm1090, %v1096, 0.0
        %1098 = vadd.xlane.f32.xlu0 %v1097
        %v1099 = vpop.xlane.xlu0 %1098
        %v1100 = vrcp.pop %v1099
        %v1101 = vmul.f32 %v1096, %v1100
        %v1102 = vpack.c.bf16 %v1101, %v1101
        %v1103 = vpack.c.bf16 %v1039, %v1039
        %v1105 = vsel %vm1090, %v1102, 0
        %vm1107 = vcmask 1043456
        %v1109 = vsel %vm1107, %v1103, 0
        %1111 = vmatprep.subr.bf16.mxu0 0
        %1112 = vmatpush1.bf16.msra.mxu0 %v1109
        %1113 = vmatprep.subr.bf16.mxu0 0
        %1114 = vmatpush1.bf16.msra.mxu0 0
        %1115 = vmatprep.subr.bf16.mxu0 0
        %1116 = vmatpush1.bf16.msra.mxu0 0
        %1117 = vmatprep.subr.bf16.mxu0 0
        %1118 = vmatpush1.bf16.msra.mxu0 0
        %1119 = vmatprep.subr.bf16.mxu0 0
        %1120 = vmatpush1.bf16.msra.mxu0 0
        %1121 = vmatprep.subr.bf16.mxu0 0
        %1122 = vmatpush1.bf16.msra.mxu0 0
        %1123 = vmatprep.subr.bf16.mxu0 0
        %1124 = vmatpush1.bf16.msra.mxu0 0
        %1125 = vmatprep.subr.bf16.mxu0 0
        %1126 = vmatpush1.bf16.msra.mxu0 0
        %1127 = vmatprep.subr.bf16.mxu0 0
        %1128 = vmatpush1.bf16.msra.mxu0 0
        %1129 = vmatprep.subr.bf16.mxu0 0
        %1130 = vmatpush1.bf16.msra.mxu0 0
        %1131 = vmatprep.subr.bf16.mxu0 0
        %1132 = vmatpush1.bf16.msra.mxu0 0
        %1133 = vmatprep.subr.bf16.mxu0 0
        %1134 = vmatpush1.bf16.msra.mxu0 0
        %1135 = vmatprep.subr.bf16.mxu0 0
        %1136 = vmatpush1.bf16.msra.mxu0 0
        %1137 = vmatprep.subr.bf16.mxu0 0
        %1138 = vmatpush1.bf16.msra.mxu0 0
        %1139 = vmatprep.subr.bf16.mxu0 0
        %1140 = vmatpush1.bf16.msra.mxu0 0
        %1141 = vmatprep.subr.bf16.mxu0 0
        %1142 = vmatpush1.bf16.msra.mxu0 0
        %1143 = vmatprep.mubr.bf16.mxu0 0
        %1144 = vmatmul.mubr.bf16.gmra.mrb[0].mxu0 %v1105
        %v1145 = vpop.f32.mrb[0].mxu0
        %v1146 = vadd.f32 %v801, %v1145
        %v1147 = vpop.f32.mrb[0].mxu0
        %v1148 = vpop.f32.mrb[0].mxu0
        %v1149 = vpop.f32.mrb[0].mxu0
        %1150 = vdwg.mxu0
        %v1151 = vld [vmem:[%s5] sm:$0x1]
        %v1152 = vld [vmem:[#allocation8] sm:$0x1]
        %1153 = vadd.xlane.f32.xlu0 %v1146
        %v1154 = vpop.xlane.xlu0 %1153
        %v1155 = vmul.f32 %v1154, 0.03125
        %v1156 = vsub.f32 %v1146, %v1155
        %v1157 = vsel %vm797, 1, 0
        %vm1158 = vcmp.eq.s32.totalorder %v1157, 1
        %v1159 = vsel %vm1158, %v1156, 0.0
        %v1160 = vmul.f32 %v1159, %v1159
        %1161 = vadd.xlane.f32.xlu0 %v1160
        %v1162 = vpop.xlane.xlu0 %1161
        %v1163 = vmul.f32 %v1162, 0.03125
        %v1164 = vadd.f32 %v1163, 1e-05
        %v1165 = vrsqrt.pop %v1164
        %v1166 = vmul.f32 %v1159, %v1165
        %v1168 = vlaneseq
        %v1169 = vshrl.u32 %v1168, 7
        %v1170 = vsub.s32 0, %v1169
        %v1171 = vrot.slane %v1151, %v1170
        %v1173 = vmul.f32 %v1166, %v1171
        %v1175 = vlaneseq
        %v1176 = vshrl.u32 %v1175, 7
        %v1177 = vsub.s32 0, %v1176
        %v1178 = vrot.slane %v1152, %v1177
        %v1180 = vadd.f32 %v1173, %v1178
        %v1181 = vld [vmem:[#allocation10] sm:$0xf]
        %v1182 = vld [vmem:[#allocation10 + $0x4] sm:$0xf]
        %v1183 = vld [vmem:[#allocation10 + $0x8] sm:$0xf]
        %v1184 = vld [vmem:[#allocation10 + $0xc] sm:$0xf]
        %v1185 = vld [vmem:[#allocation10 + $0x10] sm:$0xf]
        %v1186 = vld [vmem:[#allocation10 + $0x14] sm:$0xf]
        %v1187 = vld [vmem:[#allocation10 + $0x18] sm:$0xf]
        %v1188 = vld [vmem:[#allocation10 + $0x1c] sm:$0xf]
        %v1189 = vld [vmem:[#allocation10 + $0x20] sm:$0xf]
        %v1190 = vld [vmem:[#allocation10 + $0x24] sm:$0xf]
        %v1191 = vld [vmem:[#allocation10 + $0x28] sm:$0xf]
        %v1192 = vld [vmem:[#allocation10 + $0x2c] sm:$0xf]
        %v1193 = vld [vmem:[#allocation10 + $0x30] sm:$0xf]
        %v1194 = vld [vmem:[#allocation10 + $0x34] sm:$0xf]
        %v1195 = vld [vmem:[#allocation10 + $0x38] sm:$0xf]
        %v1196 = vld [vmem:[#allocation10 + $0x3c] sm:$0xf]
        %v1197 = vpack.c.bf16 %v1180, %v1180
        %v1214 = vunpack.c.l.b16 %v1181
        %v1215 = vunpack.c.l.b16 %v1182
        %v1216 = vunpack.c.l.b16 %v1183
        %v1217 = vunpack.c.l.b16 %v1184
        %v1218 = vunpack.c.l.b16 %v1185
        %v1219 = vunpack.c.l.b16 %v1186
        %v1220 = vunpack.c.l.b16 %v1187
        %v1221 = vunpack.c.l.b16 %v1188
        %v1222 = vunpack.c.l.b16 %v1189
        %v1223 = vunpack.c.l.b16 %v1190
        %v1224 = vunpack.c.l.b16 %v1191
        %v1225 = vunpack.c.l.b16 %v1192
        %v1226 = vunpack.c.l.b16 %v1193
        %v1227 = vunpack.c.l.b16 %v1194
        %v1228 = vunpack.c.l.b16 %v1195
        %v1229 = vunpack.c.l.b16 %v1196
        %v1230 = vpack.c.b16 %v1215, %v1214
        %v1231 = vpack.c.b16 %v1217, %v1216
        %v1232 = vpack.c.b16 %v1219, %v1218
        %v1233 = vpack.c.b16 %v1221, %v1220
        %v1234 = vpack.c.b16 %v1223, %v1222
        %v1235 = vpack.c.b16 %v1225, %v1224
        %v1236 = vpack.c.b16 %v1227, %v1226
        %v1237 = vpack.c.b16 %v1229, %v1228
        %1246 = vmatprep.subr.bf16.mxu0 0
        %1247 = vmatpush1.bf16.msra.mxu0 %v1230
        %1248 = vmatprep.subr.bf16.mxu0 0
        %1249 = vmatpush1.bf16.msra.mxu0 %v1231
        %1250 = vmatprep.subr.bf16.mxu0 0
        %1251 = vmatpush1.bf16.msra.mxu0 %v1232
        %1252 = vmatprep.subr.bf16.mxu0 0
        %1253 = vmatpush1.bf16.msra.mxu0 %v1233
        %1254 = vmatprep.subr.bf16.mxu0 0
        %1255 = vmatpush1.bf16.msra.mxu0 %v1234
        %1256 = vmatprep.subr.bf16.mxu0 0
        %1257 = vmatpush1.bf16.msra.mxu0 %v1235
        %1258 = vmatprep.subr.bf16.mxu0 0
        %1259 = vmatpush1.bf16.msra.mxu0 %v1236
        %1260 = vmatprep.subr.bf16.mxu0 0
        %1261 = vmatpush1.bf16.msra.mxu0 %v1237
        %1262 = vmatprep.subr.bf16.mxu0 0
        %1263 = vmatpush1.bf16.msra.mxu0 0
        %1264 = vmatprep.subr.bf16.mxu0 0
        %1265 = vmatpush1.bf16.msra.mxu0 0
        %1266 = vmatprep.subr.bf16.mxu0 0
        %1267 = vmatpush1.bf16.msra.mxu0 0
        %1268 = vmatprep.subr.bf16.mxu0 0
        %1269 = vmatpush1.bf16.msra.mxu0 0
        %1270 = vmatprep.subr.bf16.mxu0 0
        %1271 = vmatpush1.bf16.msra.mxu0 0
        %1272 = vmatprep.subr.bf16.mxu0 0
        %1273 = vmatpush1.bf16.msra.mxu0 0
        %1274 = vmatprep.subr.bf16.mxu0 0
        %1275 = vmatpush1.bf16.msra.mxu0 0
        %1276 = vmatprep.subr.bf16.mxu0 0
        %1277 = vmatpush1.bf16.msra.mxu0 0
        %1278 = vmatprep.mubr.bf16.mxu0 0
        %1279 = vmatmul.mubr.bf16.gmra.mrb[0].mxu0 %v1197
        %v1280 = vpop.f32.mrb[0].mxu0
        %v1281 = vadd.f32 0.0, %v1280
        %v1282 = vpop.f32.mrb[0].mxu0
        %v1283 = vpop.f32.mrb[0].mxu0
        %v1284 = vpop.f32.mrb[0].mxu0
        %1285 = vdwg.mxu0
        %v1286 = vld [vmem:[#allocation11] sm:$0xff]
        %v1287 = vld [vmem:[#allocation11 + $0x8] sm:$0xff]
        %v1288 = vld [vmem:[#allocation11 + $0x10] sm:$0xff]
        %v1289 = vld [vmem:[#allocation11 + $0x18] sm:$0xff]
        %v1290 = vld [vmem:[#allocation11 + $0x20] sm:$0xff]
        %v1291 = vld [vmem:[#allocation11 + $0x28] sm:$0xff]
        %v1292 = vld [vmem:[#allocation11 + $0x30] sm:$0xff]
        %v1293 = vld [vmem:[#allocation11 + $0x38] sm:$0xff]
        %v1294 = vld [vmem:[#allocation11 + $0x40] sm:$0xff]
        %v1295 = vld [vmem:[#allocation11 + $0x48] sm:$0xff]
        %v1296 = vld [vmem:[#allocation11 + $0x50] sm:$0xff]
        %v1297 = vld [vmem:[#allocation11 + $0x58] sm:$0xff]
        %v1298 = vld [vmem:[#allocation11 + $0x60] sm:$0xff]
        %v1299 = vld [vmem:[#allocation11 + $0x68] sm:$0xff]
        %v1300 = vld [vmem:[#allocation11 + $0x70] sm:$0xff]
        %v1301 = vld [vmem:[#allocation11 + $0x78] sm:$0xff]
        %v1302 = vpack.c.bf16 %v799, %v799
        %v1319 = vunpack.c.l.b16 %v1286
        %v1320 = vunpack.c.h.b16 %v1286
        %v1321 = vunpack.c.l.b16 %v1287
        %v1322 = vunpack.c.h.b16 %v1287
        %v1323 = vunpack.c.l.b16 %v1288
        %v1324 = vunpack.c.h.b16 %v1288
        %v1325 = vunpack.c.l.b16 %v1289
        %v1326 = vunpack.c.h.b16 %v1289
        %v1327 = vunpack.c.l.b16 %v1290
        %v1328 = vunpack.c.h.b16 %v1290
        %v1329 = vunpack.c.l.b16 %v1291
        %v1330 = vunpack.c.h.b16 %v1291
        %v1331 = vunpack.c.l.b16 %v1292
        %v1332 = vunpack.c.h.b16 %v1292
        %v1333 = vunpack.c.l.b16 %v1293
        %v1334 = vunpack.c.h.b16 %v1293
        %v1335 = vunpack.c.l.b16 %v1294
        %v1336 = vunpack.c.h.b16 %v1294
        %v1337 = vunpack.c.l.b16 %v1295
        %v1338 = vunpack.c.h.b16 %v1295
        %v1339 = vunpack.c.l.b16 %v1296
        %v1340 = vunpack.c.h.b16 %v1296
        %v1341 = vunpack.c.l.b16 %v1297
        %v1342 = vunpack.c.h.b16 %v1297
        %v1343 = vunpack.c.l.b16 %v1298
        %v1344 = vunpack.c.h.b16 %v1298
        %v1345 = vunpack.c.l.b16 %v1299
        %v1346 = vunpack.c.h.b16 %v1299
        %v1347 = vunpack.c.l.b16 %v1300
        %v1348 = vunpack.c.h.b16 %v1300
        %v1349 = vunpack.c.l.b16 %v1301
        %v1350 = vunpack.c.h.b16 %v1301
        %v1351 = vpack.c.b16 %v1321, %v1319
        %v1352 = vpack.c.b16 %v1322, %v1320
        %v1353 = vpack.c.b16 %v1325, %v1323
        %v1354 = vpack.c.b16 %v1326, %v1324
        %v1355 = vpack.c.b16 %v1329, %v1327
        %v1356 = vpack.c.b16 %v1330, %v1328
        %v1357 = vpack.c.b16 %v1333, %v1331
        %v1358 = vpack.c.b16 %v1334, %v1332
        %v1359 = vpack.c.b16 %v1337, %v1335
        %v1360 = vpack.c.b16 %v1338, %v1336
        %v1361 = vpack.c.b16 %v1341, %v1339
        %v1362 = vpack.c.b16 %v1342, %v1340
        %v1363 = vpack.c.b16 %v1345, %v1343
        %v1364 = vpack.c.b16 %v1346, %v1344
        %v1365 = vpack.c.b16 %v1349, %v1347
        %v1366 = vpack.c.b16 %v1350, %v1348
        %1383 = vmatprep.subr.bf16.mxu0 %v1352
        %1384 = vmatpush1.bf16.msra.mxu0 %v1351
        %1385 = vmatprep.subr.bf16.mxu0 %v1354
        %1386 = vmatpush1.bf16.msra.mxu0 %v1353
        %1387 = vmatprep.subr.bf16.mxu0 %v1356
        %1388 = vmatpush1.bf16.msra.mxu0 %v1355
        %1389 = vmatprep.subr.bf16.mxu0 %v1358
        %1390 = vmatpush1.bf16.msra.mxu0 %v1357
        %1391 = vmatprep.subr.bf16.mxu0 %v1360
        %1392 = vmatpush1.bf16.msra.mxu0 %v1359
        %1393 = vmatprep.subr.bf16.mxu0 %v1362
        %1394 = vmatpush1.bf16.msra.mxu0 %v1361
        %1395 = vmatprep.subr.bf16.mxu0 %v1364
        %1396 = vmatpush1.bf16.msra.mxu0 %v1363
        %1397 = vmatprep.subr.bf16.mxu0 %v1366
        %1398 = vmatpush1.bf16.msra.mxu0 %v1365
        %1399 = vmatprep.subr.bf16.mxu0 0
        %1400 = vmatpush1.bf16.msra.mxu0 0
        %1401 = vmatprep.subr.bf16.mxu0 0
        %1402 = vmatpush1.bf16.msra.mxu0 0
        %1403 = vmatprep.subr.bf16.mxu0 0
        %1404 = vmatpush1.bf16.msra.mxu0 0
        %1405 = vmatprep.subr.bf16.mxu0 0
        %1406 = vmatpush1.bf16.msra.mxu0 0
        %1407 = vmatprep.subr.bf16.mxu0 0
        %1408 = vmatpush1.bf16.msra.mxu0 0
        %1409 = vmatprep.subr.bf16.mxu0 0
        %1410 = vmatpush1.bf16.msra.mxu0 0
        %1411 = vmatprep.subr.bf16.mxu0 0
        %1412 = vmatpush1.bf16.msra.mxu0 0
        %1413 = vmatprep.subr.bf16.mxu0 0
        %1414 = vmatpush1.bf16.msra.mxu0 0
        %1415 = vmatprep.mubr.bf16.mxu0 0
        %1416 = vmatmul.mubr.bf16.gmra.mrb[0].mxu0 %v1302
        %v1417 = vpop.f32.mrb[0].mxu0
        %v1418 = vadd.f32 0.0, %v1417
        %v1419 = vpop.f32.mrb[0].mxu0
        %v1420 = vadd.f32 0.0, %v1419
        %v1421 = vpop.f32.mrb[0].mxu0
        %v1422 = vpop.f32.mrb[0].mxu0
        %1423 = vdwg.mxu0
        %v1424 = vpack.c.bf16 %v1281, %v1281
        %v1425 = vpack.c.bf16 %v1418, %v1418
        %1426 = vmatprep.subr.bf16.mxu0 0
        %1427 = vmatpush1.bf16.xpose.msra.mxu0 %v1425
        %1428 = vmatprep.subr.bf16.mxu0 0
        %1429 = vmatpush1.bf16.xpose.msra.mxu0 0
        %1430 = vmatprep.subr.bf16.mxu0 0
        %1431 = vmatpush1.bf16.xpose.msra.mxu0 0
        %1432 = vmatprep.subr.bf16.mxu0 0
        %1433 = vmatpush1.bf16.xpose.msra.mxu0 0
        %1434 = vmatprep.subr.bf16.mxu0 0
        %1435 = vmatpush1.bf16.xpose.msra.mxu0 0
        %1436 = vmatprep.subr.bf16.mxu0 0
        %1437 = vmatpush1.bf16.xpose.msra.mxu0 0
        %1438 = vmatprep.subr.bf16.mxu0 0
        %1439 = vmatpush1.bf16.xpose.msra.mxu0 0
        %1440 = vmatprep.subr.bf16.mxu0 0
        %1441 = vmatpush1.bf16.xpose.msra.mxu0 0
        %1442 = vmatprep.subr.bf16.mxu0 0
        %1443 = vmatpush1.bf16.xpose.msra.mxu0 0
        %1444 = vmatprep.subr.bf16.mxu0 0
        %1445 = vmatpush1.bf16.xpose.msra.mxu0 0
        %1446 = vmatprep.subr.bf16.mxu0 0
        %1447 = vmatpush1.bf16.xpose.msra.mxu0 0
        %1448 = vmatprep.subr.bf16.mxu0 0
        %1449 = vmatpush1.bf16.xpose.msra.mxu0 0
        %1450 = vmatprep.subr.bf16.mxu0 0
        %1451 = vmatpush1.bf16.xpose.msra.mxu0 0
        %1452 = vmatprep.subr.bf16.mxu0 0
        %1453 = vmatpush1.bf16.xpose.msra.mxu0 0
        %1454 = vmatprep.subr.bf16.mxu0 0
        %1455 = vmatpush1.bf16.xpose.msra.mxu0 0
        %1456 = vmatprep.subr.bf16.mxu0 0
        %1457 = vmatpush1.bf16.xpose.msra.mxu0 0
        %1458 = vmatprep.mubr.bf16.mxu0 0
        %1459 = vmatmul.mubr.bf16.gmra.mrb[0].mxu0 %v1424
        %v1460 = vpop.f32.mrb[0].mxu0
        %v1461 = vadd.f32 0.0, %v1460
        %v1462 = vpop.f32.mrb[0].mxu0
        %v1463 = vpop.f32.mrb[0].mxu0
        %v1464 = vpop.f32.mrb[0].mxu0
        %1465 = vdwg.mxu0
        %v1466 = vmul.f32 %v1461, 0.25
        %v1467 = vsel %vm1090, %v1466, -inf
        %1468 = vmax.xlane.f32.xlu0 %v1467
        %v1469 = vpop.xlane.xlu0 %1468
        %v1470 = vsub.f32 %v1466, %v1469
        %v1471 = vmul.f32 %v1470, 1.442695
        %v1472 = vpow.pop %v1471
        %v1473 = vsel %vm1090, %v1472, 0.0
        %1474 = vadd.xlane.f32.xlu0 %v1473
        %v1475 = vpop.xlane.xlu0 %1474
        %v1476 = vrcp.pop %v1475
        %v1477 = vmul.f32 %v1472, %v1476
        %v1478 = vpack.c.bf16 %v1477, %v1477
        %v1479 = vpack.c.bf16 %v1420, %v1420
        %v1481 = vsel %vm1090, %v1478, 0
        %v1484 = vsel %vm1107, %v1479, 0
        %1486 = vmatprep.subr.bf16.mxu0 0
        %1487 = vmatpush1.bf16.msra.mxu0 %v1484
        %1488 = vmatprep.subr.bf16.mxu0 0
        %1489 = vmatpush1.bf16.msra.mxu0 0
        %1490 = vmatprep.subr.bf16.mxu0 0
        %1491 = vmatpush1.bf16.msra.mxu0 0
        %1492 = vmatprep.subr.bf16.mxu0 0
        %1493 = vmatpush1.bf16.msra.mxu0 0
        %1494 = vmatprep.subr.bf16.mxu0 0
        %1495 = vmatpush1.bf16.msra.mxu0 0
        %1496 = vmatprep.subr.bf16.mxu0 0
        %1497 = vmatpush1.bf16.msra.mxu0 0
        %1498 = vmatprep.subr.bf16.mxu0 0
        %1499 = vmatpush1.bf16.msra.mxu0 0
        %1500 = vmatprep.subr.bf16.mxu0 0
        %1501 = vmatpush1.bf16.msra.mxu0 0
        %1502 = vmatprep.subr.bf16.mxu0 0
        %1503 = vmatpush1.bf16.msra.mxu0 0
        %1504 = vmatprep.subr.bf16.mxu0 0
        %1505 = vmatpush1.bf16.msra.mxu0 0
        %1506 = vmatprep.subr.bf16.mxu0 0
        %1507 = vmatpush1.bf16.msra.mxu0 0
        %1508 = vmatprep.subr.bf16.mxu0 0
        %1509 = vmatpush1.bf16.msra.mxu0 0
        %1510 = vmatprep.subr.bf16.mxu0 0
        %1511 = vmatpush1.bf16.msra.mxu0 0
        %1512 = vmatprep.subr.bf16.mxu0 0
        %1513 = vmatpush1.bf16.msra.mxu0 0
        %1514 = vmatprep.subr.bf16.mxu0 0
        %1515 = vmatpush1.bf16.msra.mxu0 0
        %1516 = vmatprep.subr.bf16.mxu0 0
        %1517 = vmatpush1.bf16.msra.mxu0 0
        %1518 = vmatprep.mubr.bf16.mxu0 0
        %1519 = vmatmul.mubr.bf16.gmra.mrb[0].mxu0 %v1481
        %v1520 = vpop.f32.mrb[0].mxu0
        %v1521 = vadd.f32 0.0, %v1520
        %v1522 = vpop.f32.mrb[0].mxu0
        %v1523 = vpop.f32.mrb[0].mxu0
        %v1524 = vpop.f32.mrb[0].mxu0
        %1525 = vdwg.mxu0
        %v1526 = vld [vmem:[#allocation13] sm:$0xf]
        %v1527 = vld [vmem:[#allocation13 + $0x4] sm:$0xf]
        %v1528 = vld [vmem:[#allocation13 + $0x8] sm:$0xf]
        %v1529 = vld [vmem:[#allocation13 + $0xc] sm:$0xf]
        %v1530 = vld [vmem:[#allocation13 + $0x10] sm:$0xf]
        %v1531 = vld [vmem:[#allocation13 + $0x14] sm:$0xf]
        %v1532 = vld [vmem:[#allocation13 + $0x18] sm:$0xf]
        %v1533 = vld [vmem:[#allocation13 + $0x1c] sm:$0xf]
        %v1534 = vld [vmem:[#allocation13 + $0x20] sm:$0xf]
        %v1535 = vld [vmem:[#allocation13 + $0x24] sm:$0xf]
        %v1536 = vld [vmem:[#allocation13 + $0x28] sm:$0xf]
        %v1537 = vld [vmem:[#allocation13 + $0x2c] sm:$0xf]
        %v1538 = vld [vmem:[#allocation13 + $0x30] sm:$0xf]
        %v1539 = vld [vmem:[#allocation13 + $0x34] sm:$0xf]
        %v1540 = vld [vmem:[#allocation13 + $0x38] sm:$0xf]
        %v1541 = vld [vmem:[#allocation13 + $0x3c] sm:$0xf]
        %v1542 = vpack.c.bf16 %v1521, %v1521
        %v1543 = vld [vmem:[#allocation14] sm:$0x1]
        %v1545 = vlaneseq
        %v1546 = vshrl.u32 %v1545, 7
        %v1547 = vsub.s32 0, %v1546
        %v1548 = vrot.slane %v1543, %v1547
        %v1566 = vunpack.c.l.b16 %v1526
        %v1567 = vunpack.c.l.b16 %v1527
        %v1568 = vunpack.c.l.b16 %v1528
        %v1569 = vunpack.c.l.b16 %v1529
        %v1570 = vunpack.c.l.b16 %v1530
        %v1571 = vunpack.c.l.b16 %v1531
        %v1572 = vunpack.c.l.b16 %v1532
        %v1573 = vunpack.c.l.b16 %v1533
        %v1574 = vunpack.c.l.b16 %v1534
        %v1575 = vunpack.c.l.b16 %v1535
        %v1576 = vunpack.c.l.b16 %v1536
        %v1577 = vunpack.c.l.b16 %v1537
        %v1578 = vunpack.c.l.b16 %v1538
        %v1579 = vunpack.c.l.b16 %v1539
        %v1580 = vunpack.c.l.b16 %v1540
        %v1581 = vunpack.c.l.b16 %v1541
        %v1582 = vpack.c.b16 %v1567, %v1566
        %v1583 = vpack.c.b16 %v1569, %v1568
        %v1584 = vpack.c.b16 %v1571, %v1570
        %v1585 = vpack.c.b16 %v1573, %v1572
        %v1586 = vpack.c.b16 %v1575, %v1574
        %v1587 = vpack.c.b16 %v1577, %v1576
        %v1588 = vpack.c.b16 %v1579, %v1578
        %v1589 = vpack.c.b16 %v1581, %v1580
        %1598 = vmatprep.subr.bf16.mxu0 0
        %1599 = vmatpush1.bf16.msra.mxu0 %v1582
        %1600 = vmatprep.subr.bf16.mxu0 0
        %1601 = vmatpush1.bf16.msra.mxu0 %v1583
        %1602 = vmatprep.subr.bf16.mxu0 0
        %1603 = vmatpush1.bf16.msra.mxu0 %v1584
        %1604 = vmatprep.subr.bf16.mxu0 0
        %1605 = vmatpush1.bf16.msra.mxu0 %v1585
        %1606 = vmatprep.subr.bf16.mxu0 0
        %1607 = vmatpush1.bf16.msra.mxu0 %v1586
        %1608 = vmatprep.subr.bf16.mxu0 0
        %1609 = vmatpush1.bf16.msra.mxu0 %v1587
        %1610 = vmatprep.subr.bf16.mxu0 0
        %1611 = vmatpush1.bf16.msra.mxu0 %v1588
        %1612 = vmatprep.subr.bf16.mxu0 0
        %1613 = vmatpush1.bf16.msra.mxu0 %v1589
        %1614 = vmatprep.subr.bf16.mxu0 0
        %1615 = vmatpush1.bf16.msra.mxu0 0
        %1616 = vmatprep.subr.bf16.mxu0 0
        %1617 = vmatpush1.bf16.msra.mxu0 0
        %1618 = vmatprep.subr.bf16.mxu0 0
        %1619 = vmatpush1.bf16.msra.mxu0 0
        %1620 = vmatprep.subr.bf16.mxu0 0
        %1621 = vmatpush1.bf16.msra.mxu0 0
        %1622 = vmatprep.subr.bf16.mxu0 0
        %1623 = vmatpush1.bf16.msra.mxu0 0
        %1624 = vmatprep.subr.bf16.mxu0 0
        %1625 = vmatpush1.bf16.msra.mxu0 0
        %1626 = vmatprep.subr.bf16.mxu0 0
        %1627 = vmatpush1.bf16.msra.mxu0 0
        %1628 = vmatprep.subr.bf16.mxu0 0
        %1629 = vmatpush1.bf16.msra.mxu0 0
        %1630 = vmatprep.mubr.bf16.mxu0 0
        %1631 = vmatmul.mubr.bf16.gmra.mrb[0].mxu0 %v1542
        %v1632 = vpop.f32.mrb[0].mxu0
        %v1633 = vadd.f32 %v1548, %v1632
        %v1634 = vpop.f32.mrb[0].mxu0
        %v1635 = vpop.f32.mrb[0].mxu0
        %v1636 = vpop.f32.mrb[0].mxu0
        %1637 = vdwg.mxu0
        %v1638 = vadd.f32 %v1180, %v1633
        %v1639 = vld [vmem:[#allocation16] sm:$0x1]
        %v1640 = vld [vmem:[#allocation17] sm:$0x1]
        %1641 = vadd.xlane.f32.xlu0 %v1638
        %v1642 = vpop.xlane.xlu0 %1641
        %v1643 = vmul.f32 %v1642, 0.03125
        %v1644 = vsub.f32 %v1638, %v1643
        %v1645 = vsel %vm1158, %v1644, 0.0
        %v1646 = vmul.f32 %v1645, %v1645
        %1647 = vadd.xlane.f32.xlu0 %v1646
        %v1648 = vpop.xlane.xlu0 %1647
        %v1649 = vmul.f32 %v1648, 0.03125
        %v1650 = vadd.f32 %v1649, 1e-05
        %v1651 = vrsqrt.pop %v1650
        %v1652 = vmul.f32 %v1645, %v1651
        %v1654 = vlaneseq
        %v1655 = vshrl.u32 %v1654, 7
        %v1656 = vsub.s32 0, %v1655
        %v1657 = vrot.slane %v1639, %v1656
        %v1659 = vmul.f32 %v1652, %v1657
        %v1661 = vlaneseq
        %v1662 = vshrl.u32 %v1661, 7
        %v1663 = vsub.s32 0, %v1662
        %v1664 = vrot.slane %v1640, %v1663
        %v1666 = vadd.f32 %v1659, %v1664
        %v1667 = vld [vmem:[%s13] sm:$0xf]
        %v1668 = vld [vmem:[%s13 + $0x4] sm:$0xf]
        %v1669 = vld [vmem:[%s13 + $0x8] sm:$0xf]
        %v1670 = vld [vmem:[%s13 + $0xc] sm:$0xf]
        %v1671 = vld [vmem:[%s13 + $0x10] sm:$0xf]
        %v1672 = vld [vmem:[%s13 + $0x14] sm:$0xf]
        %v1673 = vld [vmem:[%s13 + $0x18] sm:$0xf]
        %v1674 = vld [vmem:[%s13 + $0x1c] sm:$0xf]
        %v1675 = vld [vmem:[%s13 + $0x20] sm:$0xf]
        %v1676 = vld [vmem:[%s13 + $0x24] sm:$0xf]
        %v1677 = vld [vmem:[%s13 + $0x28] sm:$0xf]
        %v1678 = vld [vmem:[%s13 + $0x2c] sm:$0xf]
        %v1679 = vld [vmem:[%s13 + $0x30] sm:$0xf]
        %v1680 = vld [vmem:[%s13 + $0x34] sm:$0xf]
        %v1681 = vld [vmem:[%s13 + $0x38] sm:$0xf]
        %v1682 = vld [vmem:[%s13 + $0x3c] sm:$0xf]
        %v1683 = vpack.c.bf16 %v1666, %v1666
        %v1684 = vld [vmem:[%s14] sm:$0x1]
        %v1686 = vlaneseq
        %v1687 = vshrl.u32 %v1686, 7
        %v1688 = vsub.s32 0, %v1687
        %v1689 = vrot.slane %v1684, %v1688
        %v1707 = vunpack.c.l.b16 %v1667
        %v1708 = vunpack.c.l.b16 %v1668
        %v1709 = vunpack.c.l.b16 %v1669
        %v1710 = vunpack.c.l.b16 %v1670
        %v1711 = vunpack.c.l.b16 %v1671
        %v1712 = vunpack.c.l.b16 %v1672
        %v1713 = vunpack.c.l.b16 %v1673
        %v1714 = vunpack.c.l.b16 %v1674
        %v1715 = vunpack.c.l.b16 %v1675
        %v1716 = vunpack.c.l.b16 %v1676
        %v1717 = vunpack.c.l.b16 %v1677
        %v1718 = vunpack.c.l.b16 %v1678
        %v1719 = vunpack.c.l.b16 %v1679
        %v1720 = vunpack.c.l.b16 %v1680
        %v1721 = vunpack.c.l.b16 %v1681
        %v1722 = vunpack.c.l.b16 %v1682
        %v1723 = vpack.c.b16 %v1708, %v1707
        %v1724 = vpack.c.b16 %v1710, %v1709
        %v1725 = vpack.c.b16 %v1712, %v1711
        %v1726 = vpack.c.b16 %v1714, %v1713
        %v1727 = vpack.c.b16 %v1716, %v1715
        %v1728 = vpack.c.b16 %v1718, %v1717
        %v1729 = vpack.c.b16 %v1720, %v1719
        %v1730 = vpack.c.b16 %v1722, %v1721
        %1739 = vmatprep.subr.bf16.mxu0 0
        %1740 = vmatpush1.bf16.msra.mxu0 %v1723
        %1741 = vmatprep.subr.bf16.mxu0 0
        %1742 = vmatpush1.bf16.msra.mxu0 %v1724
        %1743 = vmatprep.subr.bf16.mxu0 0
        %1744 = vmatpush1.bf16.msra.mxu0 %v1725
        %1745 = vmatprep.subr.bf16.mxu0 0
        %1746 = vmatpush1.bf16.msra.mxu0 %v1726
        %1747 = vmatprep.subr.bf16.mxu0 0
        %1748 = vmatpush1.bf16.msra.mxu0 %v1727
        %1749 = vmatprep.subr.bf16.mxu0 0
        %1750 = vmatpush1.bf16.msra.mxu0 %v1728
        %1751 = vmatprep.subr.bf16.mxu0 0
        %1752 = vmatpush1.bf16.msra.mxu0 %v1729
        %1753 = vmatprep.subr.bf16.mxu0 0
        %1754 = vmatpush1.bf16.msra.mxu0 %v1730
        %1755 = vmatprep.subr.bf16.mxu0 0
        %1756 = vmatpush1.bf16.msra.mxu0 0
        %1757 = vmatprep.subr.bf16.mxu0 0
        %1758 = vmatpush1.bf16.msra.mxu0 0
        %1759 = vmatprep.subr.bf16.mxu0 0
        %1760 = vmatpush1.bf16.msra.mxu0 0
        %1761 = vmatprep.subr.bf16.mxu0 0
        %1762 = vmatpush1.bf16.msra.mxu0 0
        %1763 = vmatprep.subr.bf16.mxu0 0
        %1764 = vmatpush1.bf16.msra.mxu0 0
        %1765 = vmatprep.subr.bf16.mxu0 0
        %1766 = vmatpush1.bf16.msra.mxu0 0
        %1767 = vmatprep.subr.bf16.mxu0 0
        %1768 = vmatpush1.bf16.msra.mxu0 0
        %1769 = vmatprep.subr.bf16.mxu0 0
        %1770 = vmatpush1.bf16.msra.mxu0 0
        %1771 = vmatprep.mubr.bf16.mxu0 0
        %1772 = vmatmul.mubr.bf16.gmra.mrb[0].mxu0 %v1683
        %v1773 = vpop.f32.mrb[0].mxu0
        %v1774 = vadd.f32 %v1689, %v1773
        %v1775 = vpop.f32.mrb[0].mxu0
        %v1776 = vpop.f32.mrb[0].mxu0
        %v1777 = vpop.f32.mrb[0].mxu0
        %1778 = vdwg.mxu0
        %v1779 = vmax.f32 %v1774, 0.0
        %v1780 = vld [vmem:[#allocation19] sm:$0xf]
        %v1781 = vld [vmem:[#allocation19 + $0x4] sm:$0xf]
        %v1782 = vld [vmem:[#allocation19 + $0x8] sm:$0xf]
        %v1783 = vld [vmem:[#allocation19 + $0xc] sm:$0xf]
        %v1784 = vld [vmem:[#allocation19 + $0x10] sm:$0xf]
        %v1785 = vld [vmem:[#allocation19 + $0x14] sm:$0xf]
        %v1786 = vld [vmem:[#allocation19 + $0x18] sm:$0xf]
        %v1787 = vld [vmem:[#allocation19 + $0x1c] sm:$0xf]
        %v1788 = vld [vmem:[#allocation19 + $0x20] sm:$0xf]
        %v1789 = vld [vmem:[#allocation19 + $0x24] sm:$0xf]
        %v1790 = vld [vmem:[#allocation19 + $0x28] sm:$0xf]
        %v1791 = vld [vmem:[#allocation19 + $0x2c] sm:$0xf]
        %v1792 = vld [vmem:[#allocation19 + $0x30] sm:$0xf]
        %v1793 = vld [vmem:[#allocation19 + $0x34] sm:$0xf]
        %v1794 = vld [vmem:[#allocation19 + $0x38] sm:$0xf]
        %v1795 = vld [vmem:[#allocation19 + $0x3c] sm:$0xf]
        %v1796 = vpack.c.bf16 %v1779, %v1779
        %v1797 = vld [vmem:[%s16] sm:$0x1]
        %v1799 = vlaneseq
        %v1800 = vshrl.u32 %v1799, 7
        %v1801 = vsub.s32 0, %v1800
        %v1802 = vrot.slane %v1797, %v1801
        %v1820 = vunpack.c.l.b16 %v1780
        %v1821 = vunpack.c.l.b16 %v1781
        %v1822 = vunpack.c.l.b16 %v1782
        %v1823 = vunpack.c.l.b16 %v1783
        %v1824 = vunpack.c.l.b16 %v1784
        %v1825 = vunpack.c.l.b16 %v1785
        %v1826 = vunpack.c.l.b16 %v1786
        %v1827 = vunpack.c.l.b16 %v1787
        %v1828 = vunpack.c.l.b16 %v1788
        %v1829 = vunpack.c.l.b16 %v1789
        %v1830 = vunpack.c.l.b16 %v1790
        %v1831 = vunpack.c.l.b16 %v1791
        %v1832 = vunpack.c.l.b16 %v1792
        %v1833 = vunpack.c.l.b16 %v1793
        %v1834 = vunpack.c.l.b16 %v1794
        %v1835 = vunpack.c.l.b16 %v1795
        %v1836 = vpack.c.b16 %v1821, %v1820
        %v1837 = vpack.c.b16 %v1823, %v1822
        %v1838 = vpack.c.b16 %v1825, %v1824
        %v1839 = vpack.c.b16 %v1827, %v1826
        %v1840 = vpack.c.b16 %v1829, %v1828
        %v1841 = vpack.c.b16 %v1831, %v1830
        %v1842 = vpack.c.b16 %v1833, %v1832
        %v1843 = vpack.c.b16 %v1835, %v1834
        %1852 = vmatprep.subr.bf16.mxu0 0
        %1853 = vmatpush1.bf16.msra.mxu0 %v1836
        %1854 = vmatprep.subr.bf16.mxu0 0
        %1855 = vmatpush1.bf16.msra.mxu0 %v1837
        %1856 = vmatprep.subr.bf16.mxu0 0
        %1857 = vmatpush1.bf16.msra.mxu0 %v1838
        %1858 = vmatprep.subr.bf16.mxu0 0
        %1859 = vmatpush1.bf16.msra.mxu0 %v1839
        %1860 = vmatprep.subr.bf16.mxu0 0
        %1861 = vmatpush1.bf16.msra.mxu0 %v1840
        %1862 = vmatprep.subr.bf16.mxu0 0
        %1863 = vmatpush1.bf16.msra.mxu0 %v1841
        %1864 = vmatprep.subr.bf16.mxu0 0
        %1865 = vmatpush1.bf16.msra.mxu0 %v1842
        %1866 = vmatprep.subr.bf16.mxu0 0
        %1867 = vmatpush1.bf16.msra.mxu0 %v1843
        %1868 = vmatprep.subr.bf16.mxu0 0
        %1869 = vmatpush1.bf16.msra.mxu0 0
        %1870 = vmatprep.subr.bf16.mxu0 0
        %1871 = vmatpush1.bf16.msra.mxu0 0
        %1872 = vmatprep.subr.bf16.mxu0 0
        %1873 = vmatpush1.bf16.msra.mxu0 0
        %1874 = vmatprep.subr.bf16.mxu0 0
        %1875 = vmatpush1.bf16.msra.mxu0 0
        %1876 = vmatprep.subr.bf16.mxu0 0
        %1877 = vmatpush1.bf16.msra.mxu0 0
        %1878 = vmatprep.subr.bf16.mxu0 0
        %1879 = vmatpush1.bf16.msra.mxu0 0
        %1880 = vmatprep.subr.bf16.mxu0 0
        %1881 = vmatpush1.bf16.msra.mxu0 0
        %1882 = vmatprep.subr.bf16.mxu0 0
        %1883 = vmatpush1.bf16.msra.mxu0 0
        %1884 = vmatprep.mubr.bf16.mxu0 0
        %1885 = vmatmul.mubr.bf16.gmra.mrb[0].mxu0 %v1796
        %v1886 = vpop.f32.mrb[0].mxu0
        %v1887 = vadd.f32 %v1802, %v1886
        %v1888 = vpop.f32.mrb[0].mxu0
        %v1889 = vpop.f32.mrb[0].mxu0
        %v1890 = vpop.f32.mrb[0].mxu0
        %1891 = vdwg.mxu0
        %v1892 = vadd.f32 %v1666, %v1887
        %v1893 = vld [vmem:[%s17] sm:$0x1]
        %v1894 = vld [vmem:[%s18] sm:$0x1]
        %1895 = vadd.xlane.f32.xlu0 %v1892
        %v1896 = vpop.xlane.xlu0 %1895
        %v1897 = vmul.f32 %v1896, 0.03125
        %v1898 = vsub.f32 %v1892, %v1897
        %v1899 = vsel %vm1158, %v1898, 0.0
        %v1900 = vmul.f32 %v1899, %v1899
        %1901 = vadd.xlane.f32.xlu0 %v1900
        %v1902 = vpop.xlane.xlu0 %1901
        %v1903 = vmul.f32 %v1902, 0.03125
        %v1904 = vadd.f32 %v1903, 1e-05
        %v1905 = vrsqrt.pop %v1904
        %v1906 = vmul.f32 %v1899, %v1905
        %v1908 = vlaneseq
        %v1909 = vshrl.u32 %v1908, 7
        %v1910 = vsub.s32 0, %v1909
        %v1911 = vrot.slane %v1893, %v1910
        %v1913 = vmul.f32 %v1906, %v1911
        %v1915 = vlaneseq
        %v1916 = vshrl.u32 %v1915, 7
        %v1917 = vsub.s32 0, %v1916
        %v1918 = vrot.slane %v1894, %v1917
        %v1920 = vadd.f32 %v1913, %v1918
        %1921 = vst [vmem:[%s789] sm:$0xff] %v1920
        %s1922 = sand.u32 %s465, 1
        %s1923 = scalar_lea.sflag [#allocation4], %s1922
        %s1924 = sand.u32 %s465, 1
        %s1925 = smul.addr %s1924, 8
        %s1926 = scalar_lea.vmem [#allocation20], %s1925
        // Predicated region
        $region141: #{tpu_custom_call.1} parent=95 // pred_check
          %p1927 = pneg %p475
        $region142: #{tpu_custom_call.1} parent=95 // pred_check_branch
          %1929 = sbr.rel (%p1927) target = $region144
        $region143: #{tpu_custom_call.1} parent=95 // pred_region
          %s1931 = ssub.s32 128, 128
          %1932 = vsyncadd %s1923, %s1931
          %s1933 = smul.addr %s43, 128
          %s1934 = scalar_lea.hbm %s19, %s1933
          %s1936 = sshll.u32 %s1926, 4
          %s1937 = int_to_ptr.vmem [resolvable:$true] %s1936
          %1939 = dma.vmem_to_hbm [thread:$0]  %s1937, 128, %s1934, %s1923
        $region144: #{tpu_custom_call.1} parent=95 // pred_fallthru
          _
      $region96: #{tpu_custom_call.1} parent=5 // pred_fallthru
        _
      %p1940 = scmp.le.s32.totalorder 2, %s38
      // Predicated region
      $region145: #{tpu_custom_call.1} parent=5 // pred_check
        %p1941 = pneg %p1940
      $region146: #{tpu_custom_call.1} parent=5 // pred_check_branch
        %1943 = sbr.rel (%p1941) target = $region148
      $region147: #{tpu_custom_call.1} parent=5 // pred_region
        %s1944 = ssub.s32 %s38, 2
        // Predicated region
        $region149: #{tpu_custom_call.1} parent=147 // pred_check
          %p1945 = pneg %p481
        $region150: #{tpu_custom_call.1} parent=147 // pred_check_branch
          %1947 = sbr.rel (%p1945) target = $region152
        $region151: #{tpu_custom_call.1} parent=147 // pred_region
          %s1948 = sand.u32 %s466, 1
          %s1949 = scalar_lea.sflag [#allocation4], %s1948
          %s1950 = sand.u32 %s466, 1
          %s1951 = smul.addr %s1950, 8
          %s1952 = scalar_lea.vmem [#allocation20], %s1951
          %1953 = dma.done %s1949, 128
        $region152: #{tpu_custom_call.1} parent=147 // pred_fallthru
          _
      $region148: #{tpu_custom_call.1} parent=5 // pred_fallthru
        _
    $region6: #{tpu_custom_call.1} parent=1 // loop_footer
      %s42 = sadd.s32 1, %s38
    $region7: #{tpu_custom_call.1} parent=1 // loop_footer_branch
      %37 = sbr.rel target = $region3
    $region8: #{tpu_custom_call.1} parent=1 // loop_exit
      _
    %1954 = vsyncpa [#allocation3], 1
    %s1955 = scalar_lea.sflag [#allocation3], 1
    %1956 = vsyncpa %s1955, 1
    %1957 = vsyncpa [#allocation6], 1
    %s1958 = scalar_lea.sflag [#allocation6], 1
    %1959 = vsyncpa %s1958, 1
    %1960 = vsyncpa [#allocation9], 1
    %1961 = vsyncpa [#allocation12], 1
    %1962 = vsyncpa [#allocation15], 1
    %1963 = vsyncpa [#allocation18], 1
    %1964 = vsyncpa [#allocation4], 1
    %s1965 = scalar_lea.sflag [#allocation4], 1
    %1966 = vsyncpa %s1965, 1

</llo_original>
